<compile_context>
chip_gen: v6e
topology: v6e:2x2x1
jax: 0.10.0
libtpu: 0.0.40
codegen_flags: <defaults>
</compile_context>

<pallas_src>
import functools

import jax
import jax.numpy as jnp
from jax.experimental import pallas as pl
from jax.experimental.pallas import tpu as pltpu


_LANE = 128


def _round_up(x, m):
    return ((x + m - 1) // m) * m


def _cdiv(a, b):
    return (a + b - 1) // b


def _sublane_multiple(dtype):
    # 8 rows/sublane-tile for 4-byte, 16 for 2-byte, 32 for 1-byte dtypes.
    return max(8, 32 // jnp.dtype(dtype).itemsize)


def _vmem_caps():
    """(tile_budget_bytes, scoped_vmem_limit_bytes), chosen per TPU generation."""
    try:
        kind = jax.devices()[0].device_kind.lower()
    except Exception:  # pragma: no cover - defensive
        kind = ""
    if "v7" in kind:
        # 64 MiB physical VMEM per TensorCore: leave headroom for Mosaic scratch.
        return 30 << 20, 48 << 20
    if any(f"v{g}" in kind for g in (2, 3, 4, 5, 6)):
        # 128 MiB physical VMEM.
        return 80 << 20, 100 << 20
    # Unknown part: size for the smallest known VMEM (v7x-safe).
    return 30 << 20, 48 << 20


def _choose_strip(tb, sub, d_pad):
    """Row-strip size: keep the f32 x0/xl strips register-resident (~<=32 KiB each)."""
    target = max(sub, ((32 * 1024) // (4 * d_pad)) // sub * sub)
    r = min(tb, target, 256)
    r = max(sub, (r // sub) * sub)
    while tb % r:
        r -= sub
    return max(r, sub)


def _choose_tiling(B, d_pad, sub, io_size, fixed_bytes, budget):
    """Returns (tb, steps, r_strip) with tb*steps >= B and tb a sublane multiple."""
    per_row = 4 * d_pad * io_size                      # double-buffered in/out tiles
    avail = max(budget - fixed_bytes - (4 << 20), budget // 4)
    tb_max = max(sub, min(avail // per_row, 16384))    # bytes-target, amortize step cost
    tb_max = (tb_max // sub) * sub

    b_min = _round_up(B, sub)
    if b_min < 2 * sub:
        steps, tb = 1, b_min
    else:
        steps = max(2, _cdiv(b_min, tb_max))
        if steps % 2:
            steps += 1                                 # even split: balanced on v7x's 2 TCs
        tb = _round_up(_cdiv(b_min, steps), sub)
    r_strip = _choose_strip(tb, sub, d_pad)
    return tb, steps, r_strip


def cross_network_kernel(x0_ref, w_ref, b_ref, out_ref, *, r_strip, use_mxu, precision):
    # x0_ref : (TB, Dp)            batch tile, I/O dtype
    # w_ref  : (L, Dp, Dp) mm-dtype lane-replicated weights   (MXU path)
    #          (L, Dp)     f32      weight rows               (fallback path)
    # b_ref  : (L, Dp)     f32      biases
    # out_ref: (TB, Dp)
    f32 = jnp.float32
    num_layers, d_pad = b_ref.shape
    tb = x0_ref.shape[0]
    mm_dtype = w_ref.dtype

    # Hoisted per-layer bias tiles: one sublane broadcast per layer per grid step
    # (JAX does not CSE broadcast_in_dim inside loops).
    b_tiles = [jnp.broadcast_to(b_ref[l:l + 1, :], (r_strip, d_pad))
               for l in range(num_layers)]
    if not use_mxu:
        w_rows = [w_ref[l:l + 1, :] for l in range(num_layers)]

    def run_strip(row0):
        x0 = x0_ref[pl.ds(row0, r_strip), :].astype(f32)
        xl = x0
        for l in range(num_layers):
            if use_mxu:
                # (xl @ W_rep)[r, j] = sum_i xl[r, i] * W_l[i] for every lane j:
                # the row-dot already broadcast across lanes, straight off the MXU.
                s_b = jax.lax.dot(xl.astype(mm_dtype), w_ref[l],
                                  precision=precision,
                                  preferred_element_type=f32)
            else:
                # Wide-D fallback: VPU multiply + XLU lane reduce.
                s_b = jnp.sum(xl * w_rows[l], axis=-1, keepdims=True)
            # Elementwise update stays in f32.
            xl = x0 * (s_b + b_tiles[l]) + xl
        out_ref[pl.ds(row0, r_strip), :] = xl.astype(out_ref.dtype)

    n_strips = tb // r_strip
    if n_strips <= 8:
        # Short static strip loop: static slice offsets, full scheduler visibility.
        for s in range(n_strips):
            run_strip(s * r_strip)
    else:
        def body(s, carry):
            run_strip(pl.multiple_of(s * r_strip, r_strip))
            return carry
        jax.lax.fori_loop(0, n_strips, body, 0)


def cross_network(x0, weights, biases):
    """x0: (B, D); weights: (L, D) or (L, D, 1); biases: (L, D) -> (B, D)."""
    if weights.ndim == 3 and weights.shape[-1] == 1:
        weights = weights[..., 0]
    B, D = x0.shape
    L = weights.shape[0]

    d_pad = max(_LANE, _round_up(D, _LANE))
    io_dtype = x0.dtype
    io_size = jnp.dtype(io_dtype).itemsize
    sub = _sublane_multiple(io_dtype)

    # bf16 x bf16 -> f32 is the native MXU fast path; for f32 I/O keep f32 operands
    # with HIGHEST precision so accuracy matches the f32 reference.
    if io_dtype == jnp.bfloat16:
        mm_dtype, precision = jnp.bfloat16, None
    else:
        mm_dtype, precision = jnp.float32, jax.lax.Precision.HIGHEST
    mm_size = jnp.dtype(mm_dtype).itemsize

    # MXU offload gate: bound the replicated-weight footprint and the redundant
    # MXU work (Dp MACs per element per layer) so the kernel stays HBM-bound.
    wrep_bytes = L * d_pad * d_pad * mm_size
    use_mxu = (wrep_bytes <= (8 << 20)
               and d_pad <= (1024 if mm_dtype == jnp.bfloat16 else 512))

    budget, limit_cap = _vmem_caps()
    tb, steps, r_strip = _choose_tiling(
        B, d_pad, sub, io_size,
        fixed_bytes=wrep_bytes if use_mxu else 0,
        budget=budget)
    b_pad = tb * steps

    # Zero-padding: padded weight/bias/x0 columns contribute 0 to xl @ W_l and the
    # padded x0/xl columns and rows stay exactly 0, so the valid (B, D) region is
    # unchanged and simply sliced back out at the end.
    x0_p = x0
    if (b_pad, d_pad) != (B, D):
        x0_p = jnp.pad(x0, ((0, b_pad - B), (0, d_pad - D)))
    w_p = weights if d_pad == D else jnp.pad(weights, ((0, 0), (0, d_pad - D)))
    b_p = biases if d_pad == D else jnp.pad(biases, ((0, 0), (0, d_pad - D)))
    b_arg = b_p.astype(jnp.float32)

    if use_mxu:
        # Host-side lane replication: W_rep[l, i, j] = W_l[i].  Resident across the
        # whole grid (same block index every step -> DMA'd once), <= 8 MiB by gate.
        w_arg = jnp.broadcast_to(w_p.astype(mm_dtype)[:, :, None], (L, d_pad, d_pad))
        w_spec = pl.BlockSpec((L, d_pad, d_pad), lambda i: (0, 0, 0))
    else:
        w_arg = w_p.astype(jnp.float32)
        w_spec = pl.BlockSpec((L, d_pad), lambda i: (0, 0))

    tile_bytes = tb * d_pad * io_size
    needed = (4 * tile_bytes                        # double-buffered in/out tiles
              + (wrep_bytes if use_mxu else 0)      # resident replicated weights
              + 4 * L * d_pad * 4                   # double-buffered params
              + (L + 6) * r_strip * d_pad * 4)      # bias tiles + strip temporaries
    vmem_limit = int(min(max(needed * 5 // 4 + (4 << 20), 16 << 20), limit_cap))

    x0_spec = pl.BlockSpec((tb, d_pad), lambda i: (i, 0))
    # Many-small-steps regime: deepen the input pipeline so DMA latency stays hidden.
    if steps >= 8 and tile_bytes < (2 << 20) and hasattr(pl, "Buffered"):
        try:
            x0_spec = pl.BlockSpec((tb, d_pad), lambda i: (i, 0),
                                   pipeline_mode=pl.Buffered(3))
        except TypeError:
            pass  # older jax without pipeline_mode: keep default double buffering

    kernel = functools.partial(cross_network_kernel, r_strip=r_strip,
                               use_mxu=use_mxu, precision=precision)

    out = pl.pallas_call(
        kernel,
        out_shape=jax.ShapeDtypeStruct((b_pad, d_pad), io_dtype),
        grid_spec=pltpu.PrefetchScalarGridSpec(
            num_scalar_prefetch=0,
            grid=(steps,),
            in_specs=[x0_spec, w_spec,
                      pl.BlockSpec((L, d_pad), lambda i: (0, 0))],
            out_specs=pl.BlockSpec((tb, d_pad), lambda i: (i, 0)),
        ),
        compiler_params=pltpu.CompilerParams(
            dimension_semantics=("parallel",),
            vmem_limit_bytes=vmem_limit,
        ),
    )(x0_p, w_arg, b_arg)

    if (b_pad, d_pad) != (B, D):
        out = out[:B, :D]
    return out


def cross_network_ref(x0, weights, biases):
    """Pure-JAX reference mirroring the PyTorch forward."""
    xl = x0.astype(jnp.float32)
    x0f = x0.astype(jnp.float32)
    for l in range(weights.shape[0]):
        w = weights[l].astype(jnp.float32)     # (D,) == W_l[:, 0]
        b = biases[l].astype(jnp.float32)
        xl_w = (xl @ w)[:, None] + b[None, :]
        xl = x0f * xl_w + xl
    return xl.astype(x0.dtype)


if __name__ == "__main__":
    B, D, L = 8, 32, 3

    key = jax.random.PRNGKey(0)
    kx, kw = jax.random.split(key)

    x0 = jax.random.normal(kx, (B, D), dtype=jnp.float32)
    # nn.Parameter(torch.randn(input_dim, 1)) per layer -> stacked (L, D) (trailing 1 squeezed)
    weights = jax.random.normal(kw, (L, D), dtype=jnp.float32)
    # nn.Parameter(torch.zeros(input_dim)) per layer -> stacked (L, D)
    biases = jnp.zeros((L, D), dtype=jnp.float32)

    out = cross_network(x0, weights, biases)
    out = jax.block_until_ready(out)

    ref = cross_network_ref(x0, weights, biases)
    assert out.shape == (B, D)
    assert jnp.allclose(out, ref, atol=5e-3, rtol=5e-3), "mismatch vs reference"

    print("KERNEL_OK")
</pallas_src>

<mosaic_0001>
module attributes {stable_mosaic.version = 11 : i64} {
  func.func @cross_network_kernel(%arg0: i32, %arg1: memref<8x128xf32, #tpu.memory_space<vmem>>, %arg2: memref<3x128x128xf32, #tpu.memory_space<vmem>>, %arg3: memref<3x128xf32, #tpu.memory_space<vmem>>, %arg4: memref<8x128xf32, #tpu.memory_space<vmem>>) attributes {dimension_semantics = [#tpu.dimension_semantics<parallel>], iteration_bounds = array<i64: 1>, scalar_prefetch = 0 : i64, scratch_operands = 0 : i64, tpu.core_type = #tpu.core_type<tc>, window_params = [{transform_indices = @transform_0, window_bounds = array<i64: 8, 128>}, {pipeline_mode = #tpu.pipeline_mode<synchronous>, transform_indices = @transform_1, window_bounds = array<i64: 3, 128, 128>}, {pipeline_mode = #tpu.pipeline_mode<synchronous>, transform_indices = @transform_2, window_bounds = array<i64: 3, 128>}, {transform_indices = @transform_3, window_bounds = array<i64: 8, 128>}]} {
    %c0 = arith.constant 0 : index
    %c0_0 = arith.constant 0 : index
    %0 = vector.load %arg3[%c0, %c0_0] : memref<3x128xf32, #tpu.memory_space<vmem>>, vector<1x128xf32>
    %1 = vector.shape_cast %0 : vector<1x128xf32> to vector<1x128xf32>
    %2 = vector.broadcast %1 : vector<1x128xf32> to vector<8x128xf32>
    %c1 = arith.constant 1 : index
    %c0_1 = arith.constant 0 : index
    %3 = vector.load %arg3[%c1, %c0_1] : memref<3x128xf32, #tpu.memory_space<vmem>>, vector<1x128xf32>
    %4 = vector.shape_cast %3 : vector<1x128xf32> to vector<1x128xf32>
    %5 = vector.broadcast %4 : vector<1x128xf32> to vector<8x128xf32>
    %c2 = arith.constant 2 : index
    %c0_2 = arith.constant 0 : index
    %6 = vector.load %arg3[%c2, %c0_2] : memref<3x128xf32, #tpu.memory_space<vmem>>, vector<1x128xf32>
    %7 = vector.shape_cast %6 : vector<1x128xf32> to vector<1x128xf32>
    %8 = vector.broadcast %7 : vector<1x128xf32> to vector<8x128xf32>
    %c0_3 = arith.constant 0 : index
    %c0_4 = arith.constant 0 : index
    %9 = vector.load %arg1[%c0_3, %c0_4] : memref<8x128xf32, #tpu.memory_space<vmem>>, vector<8x128xf32>
    %c0_5 = arith.constant 0 : index
    %c0_6 = arith.constant 0 : index
    %c0_7 = arith.constant 0 : index
    %10 = vector.load %arg2[%c0_5, %c0_6, %c0_7] : memref<3x128x128xf32, #tpu.memory_space<vmem>>, vector<1x128x128xf32>
    %11 = vector.shape_cast %10 : vector<1x128x128xf32> to vector<128x128xf32>
    %cst = arith.constant dense<0.000000e+00> : vector<8x128xf32>
    %12 = tpu.matmul %9, %11, %cst {dimension_numbers = #tpu.dot_dimension_numbers<[1], [0], [0], [1], [0, 0, 1, 1], [], []>, precision = #tpu.contract_precision<fp32>} : vector<8x128xf32>, vector<128x128xf32>, vector<8x128xf32> -> vector<8x128xf32>
    %13 = arith.addf %12, %2 : vector<8x128xf32>
    %14 = arith.mulf %9, %13 : vector<8x128xf32>
    %15 = arith.addf %14, %9 : vector<8x128xf32>
    %c1_8 = arith.constant 1 : index
    %c0_9 = arith.constant 0 : index
    %c0_10 = arith.constant 0 : index
    %16 = vector.load %arg2[%c1_8, %c0_9, %c0_10] : memref<3x128x128xf32, #tpu.memory_space<vmem>>, vector<1x128x128xf32>
    %17 = vector.shape_cast %16 : vector<1x128x128xf32> to vector<128x128xf32>
    %cst_11 = arith.constant dense<0.000000e+00> : vector<8x128xf32>
    %18 = tpu.matmul %15, %17, %cst_11 {dimension_numbers = #tpu.dot_dimension_numbers<[1], [0], [0], [1], [0, 0, 1, 1], [], []>, precision = #tpu.contract_precision<fp32>} : vector<8x128xf32>, vector<128x128xf32>, vector<8x128xf32> -> vector<8x128xf32>
    %19 = arith.addf %18, %5 : vector<8x128xf32>
    %20 = arith.mulf %9, %19 : vector<8x128xf32>
    %21 = arith.addf %20, %15 : vector<8x128xf32>
    %c2_12 = arith.constant 2 : index
    %c0_13 = arith.constant 0 : index
    %c0_14 = arith.constant 0 : index
    %22 = vector.load %arg2[%c2_12, %c0_13, %c0_14] : memref<3x128x128xf32, #tpu.memory_space<vmem>>, vector<1x128x128xf32>
    %23 = vector.shape_cast %22 : vector<1x128x128xf32> to vector<128x128xf32>
    %cst_15 = arith.constant dense<0.000000e+00> : vector<8x128xf32>
    %24 = tpu.matmul %21, %23, %cst_15 {dimension_numbers = #tpu.dot_dimension_numbers<[1], [0], [0], [1], [0, 0, 1, 1], [], []>, precision = #tpu.contract_precision<fp32>} : vector<8x128xf32>, vector<128x128xf32>, vector<8x128xf32> -> vector<8x128xf32>
    %25 = arith.addf %24, %8 : vector<8x128xf32>
    %26 = arith.mulf %9, %25 : vector<8x128xf32>
    %27 = arith.addf %26, %21 : vector<8x128xf32>
    %c0_16 = arith.constant 0 : index
    %c0_17 = arith.constant 0 : index
    %28 = vector.load %arg4[%c0_16, %c0_17] : memref<8x128xf32, #tpu.memory_space<vmem>>, vector<8x128xf32>
    tpu.vector_store %arg4[%c0_16, %c0_17], %27 {strides = array<i32>} : memref<8x128xf32, #tpu.memory_space<vmem>>, vector<8x128xf32>,
    return
  }
  func.func @transform_0(%arg0: i32) -> (i32, i32) {
    %c0_i32 = arith.constant 0 : i32
    %c0_i32_0 = arith.constant 0 : i32
    return %arg0, %c0_i32 : i32, i32
  }
  func.func @transform_1(%arg0: i32) -> (i32, i32, i32) {
    %c0_i32 = arith.constant 0 : i32
    %c0_i32_0 = arith.constant 0 : i32
    %c0_i32_1 = arith.constant 0 : i32
    %c0_i32_2 = arith.constant 0 : i32
    return %c0_i32, %c0_i32_0, %c0_i32_1 : i32, i32, i32
  }
  func.func @transform_2(%arg0: i32) -> (i32, i32) {
    %c0_i32 = arith.constant 0 : i32
    %c0_i32_0 = arith.constant 0 : i32
    %c0_i32_1 = arith.constant 0 : i32
    return %c0_i32, %c0_i32_0 : i32, i32
  }
  func.func @transform_3(%arg0: i32) -> (i32, i32) {
    %c0_i32 = arith.constant 0 : i32
    %c0_i32_0 = arith.constant 0 : i32
    return %arg0, %c0_i32 : i32, i32
  }
}

</mosaic_0001>

<llo_original>
// kernel: tpu_custom_call.1
$region0: #{tpu_custom_call.1}
  #allocation0 [shape = 'u32[]', space=smem, size = 0x4, offset = 0x4, fixed_abs, tag = 'smem constant byte address 0x4 - core index']
  #allocation1 [shape = 'u32[144,128]{1,0:T(1,128)}', space=vmem, size = 0x12000, scoped, tag = 'internal scratch']
  %s0 = inlined_call_operand.hbm [shape: f32[8,128], index: 0, kind: input, shape index: {}]
  %s1 = inlined_call_operand.hbm [shape: f32[3,128,128], index: 1, kind: input, shape index: {}]
  %s2 = inlined_call_operand.hbm [shape: f32[3,128], index: 2, kind: input, shape index: {}]
  %s3 = inlined_call_operand.hbm [shape: f32[8,128], index: 3, kind: output, shape index: {}]
  %s4 = sld [smem:[#allocation0]]
  $region34: #{tpu_custom_call.1} parent=0
    _
  %s6 = ssub.s32 1, %s4
  %s7 = scalar_select 0, %s6, %s4
  $region1: #{tpu_custom_call.1} parent=0
    #allocation2 [shape = 'u8[4096]{0}', space=vmem, size = 0x1000, scoped, tag = 'input window, operand 0, single buffered']
    #allocation3 [shape = 's32[1]{0}', space=sflag, size = 0x4, scoped, tag = 'scoped memory for tpu_custom_call.1']
    #allocation4 [shape = 's32[1]{0}', space=sflag, size = 0x4, scoped, tag = 'scoped memory for tpu_custom_call.1']
    #allocation5 [shape = 'u8[196608]{0}', space=vmem, size = 0x30000, scoped, tag = 'input window, operand 1, single buffered']
    #allocation6 [shape = 's32[1]{0}', space=sflag, size = 0x4, scoped, tag = 'scoped memory for tpu_custom_call.1']
    #allocation7 [shape = 'u8[2048]{0}', space=vmem, size = 0x800, scoped, tag = 'input window, operand 2, single buffered']
    #allocation8 [shape = 'u8[4096]{0}', space=vmem, size = 0x1000, scoped, tag = 'output window, operand 0, single buffered']
    %8 = vsyncpa [#allocation3], 0
    %9 = vsyncpa [#allocation6], 0
    %10 = vsyncpa [#allocation4], 0
    // Predicated region
    $region2: #{tpu_custom_call.1} parent=1 // pred_check
      _
    $region3: #{tpu_custom_call.1} parent=1 // pred_check_branch
      %12 = sbr.rel (0) target = $region5
    $region4: #{tpu_custom_call.1} parent=1 // pred_region
      %s14 = ssub.s32 128, 128
      %15 = vsyncadd [#allocation3], %s14
      %s17 = sshll.u32 [#allocation2], 4
      %s18 = int_to_ptr.vmem [resolvable:$true] %s17
      %20 = dma.hbm_to_vmem [thread:$0]  %s0, 128, %s18, [#allocation3]
    $region5: #{tpu_custom_call.1} parent=1 // pred_fallthru
      _
    // Predicated region
    $region6: #{tpu_custom_call.1} parent=1 // pred_check
      _
    $region7: #{tpu_custom_call.1} parent=1 // pred_check_branch
      %22 = sbr.rel (0) target = $region9
    $region8: #{tpu_custom_call.1} parent=1 // pred_region
      %s24 = ssub.s32 6144, 6144
      %25 = vsyncadd [#allocation6], %s24
      %s26 = sshll.u32 [#allocation5], 4
      %s27 = int_to_ptr.vmem [resolvable:$true] %s26
      %32 = dma.hbm_to_vmem [thread:$0]  %s1, 6144, %s27, [#allocation6], 128, 128, 8
    $region9: #{tpu_custom_call.1} parent=1 // pred_fallthru
      _
    // Predicated region
    $region10: #{tpu_custom_call.1} parent=1 // pred_check
      _
    $region11: #{tpu_custom_call.1} parent=1 // pred_check_branch
      %34 = sbr.rel (0) target = $region13
    $region12: #{tpu_custom_call.1} parent=1 // pred_region
      %s36 = ssub.s32 64, 64
      %37 = vsyncadd [#allocation6], %s36
      %s39 = sshll.u32 [#allocation7], 4
      %s40 = int_to_ptr.vmem [resolvable:$true] %s39
      %42 = dma.hbm_to_vmem [thread:$0]  %s2, 64, %s40, [#allocation6]
    $region13: #{tpu_custom_call.1} parent=1 // pred_fallthru
      _
    // Predicated region
    $region14: #{tpu_custom_call.1} parent=1 // pred_check
      _
    $region15: #{tpu_custom_call.1} parent=1 // pred_check_branch
      %44 = sbr.rel (0) target = $region17
    $region16: #{tpu_custom_call.1} parent=1 // pred_region
      %45 = dma.done [#allocation3], 128
    $region17: #{tpu_custom_call.1} parent=1 // pred_fallthru
      _
    // Predicated region
    $region18: #{tpu_custom_call.1} parent=1 // pred_check
      _
    $region19: #{tpu_custom_call.1} parent=1 // pred_check_branch
      %47 = sbr.rel (0) target = $region21
    $region20: #{tpu_custom_call.1} parent=1 // pred_region
      %48 = dma.done [#allocation6], 6144
    $region21: #{tpu_custom_call.1} parent=1 // pred_fallthru
      _
    // Predicated region
    $region22: #{tpu_custom_call.1} parent=1 // pred_check
      _
    $region23: #{tpu_custom_call.1} parent=1 // pred_check_branch
      %50 = sbr.rel (0) target = $region25
    $region24: #{tpu_custom_call.1} parent=1 // pred_region
      %51 = dma.done [#allocation6], 64
    $region25: #{tpu_custom_call.1} parent=1 // pred_fallthru
      _
    %v52 = vld [vmem:[#allocation7] sm:$0x1]
    %v53 = vlaneseq
    %v54 = vshrl.u32 %v53, 7
    %v55 = vsub.s32 0, %v54
    %v56 = vrot.slane %v52, %v55
    %v57 = vld [vmem:[#allocation7 + $0x1] sm:$0x1]
    %v58 = vlaneseq
    %v59 = vshrl.u32 %v58, 7
    %v60 = vsub.s32 0, %v59
    %v61 = vrot.slane %v57, %v60
    %v62 = vld [vmem:[#allocation7 + $0x2] sm:$0x1]
    %v63 = vlaneseq
    %v64 = vshrl.u32 %v63, 7
    %v65 = vsub.s32 0, %v64
    %v66 = vrot.slane %v62, %v65
    %v67 = vld [vmem:[#allocation2] sm:$0xff]
    %v68 = vld [vmem:[#allocation5] sm:$0xff]
    %v69 = vld [vmem:[#allocation5 + $0x8] sm:$0xff]
    %v70 = vld [vmem:[#allocation5 + $0x10] sm:$0xff]
    %v71 = vld [vmem:[#allocation5 + $0x18] sm:$0xff]
    %v72 = vld [vmem:[#allocation5 + $0x20] sm:$0xff]
    %v73 = vld [vmem:[#allocation5 + $0x28] sm:$0xff]
    %v74 = vld [vmem:[#allocation5 + $0x30] sm:$0xff]
    %v75 = vld [vmem:[#allocation5 + $0x38] sm:$0xff]
    %v76 = vld [vmem:[#allocation5 + $0x40] sm:$0xff]
    %v77 = vld [vmem:[#allocation5 + $0x48] sm:$0xff]
    %v78 = vld [vmem:[#allocation5 + $0x50] sm:$0xff]
    %v79 = vld [vmem:[#allocation5 + $0x58] sm:$0xff]
    %v80 = vld [vmem:[#allocation5 + $0x60] sm:$0xff]
    %v81 = vld [vmem:[#allocation5 + $0x68] sm:$0xff]
    %v82 = vld [vmem:[#allocation5 + $0x70] sm:$0xff]
    %v83 = vld [vmem:[#allocation5 + $0x78] sm:$0xff]
    %84 = vmatprep.subr.mxu0 0.0
    %v85 = vand.u32 %v83, 4294901760
    %86 = vmatpush1.msra.mxu0 %v85
    %87 = vmatprep.subr.mxu0 0.0
    %v88 = vand.u32 %v82, 4294901760
    %89 = vmatpush1.msra.mxu0 %v88
    %90 = vmatprep.subr.mxu0 0.0
    %v91 = vand.u32 %v81, 4294901760
    %92 = vmatpush1.msra.mxu0 %v91
    %93 = vmatprep.subr.mxu0 0.0
    %v94 = vand.u32 %v80, 4294901760
    %95 = vmatpush1.msra.mxu0 %v94
    %96 = vmatprep.subr.mxu0 0.0
    %v97 = vand.u32 %v79, 4294901760
    %98 = vmatpush1.msra.mxu0 %v97
    %99 = vmatprep.subr.mxu0 0.0
    %v100 = vand.u32 %v78, 4294901760
    %101 = vmatpush1.msra.mxu0 %v100
    %102 = vmatprep.subr.mxu0 0.0
    %v103 = vand.u32 %v77, 4294901760
    %104 = vmatpush1.msra.mxu0 %v103
    %105 = vmatprep.subr.mxu0 0.0
    %v106 = vand.u32 %v76, 4294901760
    %107 = vmatpush1.msra.mxu0 %v106
    %108 = vmatprep.subr.mxu0 0.0
    %v109 = vand.u32 %v75, 4294901760
    %110 = vmatpush1.msra.mxu0 %v109
    %111 = vmatprep.subr.mxu0 0.0
    %v112 = vand.u32 %v74, 4294901760
    %113 = vmatpush1.msra.mxu0 %v112
    %114 = vmatprep.subr.mxu0 0.0
    %v115 = vand.u32 %v73, 4294901760
    %116 = vmatpush1.msra.mxu0 %v115
    %117 = vmatprep.subr.mxu0 0.0
    %v118 = vand.u32 %v72, 4294901760
    %119 = vmatpush1.msra.mxu0 %v118
    %120 = vmatprep.subr.mxu0 0.0
    %v121 = vand.u32 %v71, 4294901760
    %122 = vmatpush1.msra.mxu0 %v121
    %123 = vmatprep.subr.mxu0 0.0
    %v124 = vand.u32 %v70, 4294901760
    %125 = vmatpush1.msra.mxu0 %v124
    %126 = vmatprep.subr.mxu0 0.0
    %v127 = vand.u32 %v69, 4294901760
    %128 = vmatpush1.msra.mxu0 %v127
    %129 = vmatprep.subr.mxu0 0.0
    %v130 = vand.u32 %v68, 4294901760
    %131 = vmatpush1.msra.mxu0 %v130
    %132 = vmatprep.subr.mxu0 0.0
    %133 = vmatpush2.msra.mxu0 0.0
    %134 = vmatprep.subr.mxu0 0.0
    %135 = vmatpush2.msra.mxu0 0.0
    %136 = vmatprep.subr.mxu0 0.0
    %137 = vmatpush2.msra.mxu0 0.0
    %138 = vmatprep.subr.mxu0 0.0
    %139 = vmatpush2.msra.mxu0 0.0
    %140 = vmatprep.subr.mxu0 0.0
    %141 = vmatpush2.msra.mxu0 0.0
    %142 = vmatprep.subr.mxu0 0.0
    %143 = vmatpush2.msra.mxu0 0.0
    %144 = vmatprep.subr.mxu0 0.0
    %145 = vmatpush2.msra.mxu0 0.0
    %146 = vmatprep.subr.mxu0 0.0
    %147 = vmatpush2.msra.mxu0 0.0
    %148 = vmatprep.subr.mxu0 0.0
    %149 = vmatpush2.msra.mxu0 0.0
    %150 = vmatprep.subr.mxu0 0.0
    %151 = vmatpush2.msra.mxu0 0.0
    %152 = vmatprep.subr.mxu0 0.0
    %153 = vmatpush2.msra.mxu0 0.0
    %154 = vmatprep.subr.mxu0 0.0
    %155 = vmatpush2.msra.mxu0 0.0
    %156 = vmatprep.subr.mxu0 0.0
    %157 = vmatpush2.msra.mxu0 0.0
    %158 = vmatprep.subr.mxu0 0.0
    %159 = vmatpush2.msra.mxu0 0.0
    %160 = vmatprep.subr.mxu0 0.0
    %161 = vmatpush2.msra.mxu0 0.0
    %162 = vmatprep.subr.mxu0 0.0
    %163 = vmatpush2.msra.mxu0 0.0
    %164 = vmatprep.mubr.f32.mxu0 0.0
    %v165 = vand.u32 %v67, 4294901760
    %v166 = vsub.f32 %v67, %v165
    %v167 = vand.u32 %v166, 4294901760
    %v168 = vsub.f32 %v166, %v167
    %v169 = vand.u32 %v168, 4294901760
    %170 = vmatmul.mubr.f32.gmra.mxu0 %v169
    %v171 = vpop.f32.mrf.mxu0
    %v172 = vadd.f32 %v56, %v171
    %v173 = vpop.f32.mrf.mxu0
    %174 = vdwg.mxu0
    %175 = vmatprep.subr.mxu0 0.0
    %v176 = vand.u32 %v83, 4294901760
    %v177 = vsub.f32 %v83, %v176
    %v178 = vand.u32 %v177, 4294901760
    %v179 = vsub.f32 %v177, %v178
    %v180 = vand.u32 %v179, 4294901760
    %181 = vmatpush1.msra.mxu0 %v180
    %182 = vmatprep.subr.mxu0 0.0
    %v183 = vand.u32 %v82, 4294901760
    %v184 = vsub.f32 %v82, %v183
    %v185 = vand.u32 %v184, 4294901760
    %v186 = vsub.f32 %v184, %v185
    %v187 = vand.u32 %v186, 4294901760
    %188 = vmatpush1.msra.mxu0 %v187
    %189 = vmatprep.subr.mxu0 0.0
    %v190 = vand.u32 %v81, 4294901760
    %v191 = vsub.f32 %v81, %v190
    %v192 = vand.u32 %v191, 4294901760
    %v193 = vsub.f32 %v191, %v192
    %v194 = vand.u32 %v193, 4294901760
    %195 = vmatpush1.msra.mxu0 %v194
    %196 = vmatprep.subr.mxu0 0.0
    %v197 = vand.u32 %v80, 4294901760
    %v198 = vsub.f32 %v80, %v197
    %v199 = vand.u32 %v198, 4294901760
    %v200 = vsub.f32 %v198, %v199
    %v201 = vand.u32 %v200, 4294901760
    %202 = vmatpush1.msra.mxu0 %v201
    %203 = vmatprep.subr.mxu0 0.0
    %v204 = vand.u32 %v79, 4294901760
    %v205 = vsub.f32 %v79, %v204
    %v206 = vand.u32 %v205, 4294901760
    %v207 = vsub.f32 %v205, %v206
    %v208 = vand.u32 %v207, 4294901760
    %209 = vmatpush1.msra.mxu0 %v208
    %210 = vmatprep.subr.mxu0 0.0
    %v211 = vand.u32 %v78, 4294901760
    %v212 = vsub.f32 %v78, %v211
    %v213 = vand.u32 %v212, 4294901760
    %v214 = vsub.f32 %v212, %v213
    %v215 = vand.u32 %v214, 4294901760
    %216 = vmatpush1.msra.mxu0 %v215
    %217 = vmatprep.subr.mxu0 0.0
    %v218 = vand.u32 %v77, 4294901760
    %v219 = vsub.f32 %v77, %v218
    %v220 = vand.u32 %v219, 4294901760
    %v221 = vsub.f32 %v219, %v220
    %v222 = vand.u32 %v221, 4294901760
    %223 = vmatpush1.msra.mxu0 %v222
    %224 = vmatprep.subr.mxu0 0.0
    %v225 = vand.u32 %v76, 4294901760
    %v226 = vsub.f32 %v76, %v225
    %v227 = vand.u32 %v226, 4294901760
    %v228 = vsub.f32 %v226, %v227
    %v229 = vand.u32 %v228, 4294901760
    %230 = vmatpush1.msra.mxu0 %v229
    %231 = vmatprep.subr.mxu0 0.0
    %v232 = vand.u32 %v75, 4294901760
    %v233 = vsub.f32 %v75, %v232
    %v234 = vand.u32 %v233, 4294901760
    %v235 = vsub.f32 %v233, %v234
    %v236 = vand.u32 %v235, 4294901760
    %237 = vmatpush1.msra.mxu0 %v236
    %238 = vmatprep.subr.mxu0 0.0
    %v239 = vand.u32 %v74, 4294901760
    %v240 = vsub.f32 %v74, %v239
    %v241 = vand.u32 %v240, 4294901760
    %v242 = vsub.f32 %v240, %v241
    %v243 = vand.u32 %v242, 4294901760
    %244 = vmatpush1.msra.mxu0 %v243
    %245 = vmatprep.subr.mxu0 0.0
    %v246 = vand.u32 %v73, 4294901760
    %v247 = vsub.f32 %v73, %v246
    %v248 = vand.u32 %v247, 4294901760
    %v249 = vsub.f32 %v247, %v248
    %v250 = vand.u32 %v249, 4294901760
    %251 = vmatpush1.msra.mxu0 %v250
    %252 = vmatprep.subr.mxu0 0.0
    %v253 = vand.u32 %v72, 4294901760
    %v254 = vsub.f32 %v72, %v253
    %v255 = vand.u32 %v254, 4294901760
    %v256 = vsub.f32 %v254, %v255
    %v257 = vand.u32 %v256, 4294901760
    %258 = vmatpush1.msra.mxu0 %v257
    %259 = vmatprep.subr.mxu0 0.0
    %v260 = vand.u32 %v71, 4294901760
    %v261 = vsub.f32 %v71, %v260
    %v262 = vand.u32 %v261, 4294901760
    %v263 = vsub.f32 %v261, %v262
    %v264 = vand.u32 %v263, 4294901760
    %265 = vmatpush1.msra.mxu0 %v264
    %266 = vmatprep.subr.mxu0 0.0
    %v267 = vand.u32 %v70, 4294901760
    %v268 = vsub.f32 %v70, %v267
    %v269 = vand.u32 %v268, 4294901760
    %v270 = vsub.f32 %v268, %v269
    %v271 = vand.u32 %v270, 4294901760
    %272 = vmatpush1.msra.mxu0 %v271
    %273 = vmatprep.subr.mxu0 0.0
    %v274 = vand.u32 %v69, 4294901760
    %v275 = vsub.f32 %v69, %v274
    %v276 = vand.u32 %v275, 4294901760
    %v277 = vsub.f32 %v275, %v276
    %v278 = vand.u32 %v277, 4294901760
    %279 = vmatpush1.msra.mxu0 %v278
    %280 = vmatprep.subr.mxu0 0.0
    %v281 = vand.u32 %v68, 4294901760
    %v282 = vsub.f32 %v68, %v281
    %v283 = vand.u32 %v282, 4294901760
    %v284 = vsub.f32 %v282, %v283
    %v285 = vand.u32 %v284, 4294901760
    %286 = vmatpush1.msra.mxu0 %v285
    %287 = vmatprep.subr.mxu0 0.0
    %288 = vmatpush2.msra.mxu0 0.0
    %289 = vmatprep.subr.mxu0 0.0
    %290 = vmatpush2.msra.mxu0 0.0
    %291 = vmatprep.subr.mxu0 0.0
    %292 = vmatpush2.msra.mxu0 0.0
    %293 = vmatprep.subr.mxu0 0.0
    %294 = vmatpush2.msra.mxu0 0.0
    %295 = vmatprep.subr.mxu0 0.0
    %296 = vmatpush2.msra.mxu0 0.0
    %297 = vmatprep.subr.mxu0 0.0
    %298 = vmatpush2.msra.mxu0 0.0
    %299 = vmatprep.subr.mxu0 0.0
    %300 = vmatpush2.msra.mxu0 0.0
    %301 = vmatprep.subr.mxu0 0.0
    %302 = vmatpush2.msra.mxu0 0.0
    %303 = vmatprep.subr.mxu0 0.0
    %304 = vmatpush2.msra.mxu0 0.0
    %305 = vmatprep.subr.mxu0 0.0
    %306 = vmatpush2.msra.mxu0 0.0
    %307 = vmatprep.subr.mxu0 0.0
    %308 = vmatpush2.msra.mxu0 0.0
    %309 = vmatprep.subr.mxu0 0.0
    %310 = vmatpush2.msra.mxu0 0.0
    %311 = vmatprep.subr.mxu0 0.0
    %312 = vmatpush2.msra.mxu0 0.0
    %313 = vmatprep.subr.mxu0 0.0
    %314 = vmatpush2.msra.mxu0 0.0
    %315 = vmatprep.subr.mxu0 0.0
    %316 = vmatpush2.msra.mxu0 0.0
    %317 = vmatprep.subr.mxu0 0.0
    %318 = vmatpush2.msra.mxu0 0.0
    %319 = vmatprep.mubr.f32.mxu0 0.0
    %v320 = vand.u32 %v67, 4294901760
    %321 = vmatmul.mubr.f32.gmra.mxu0 %v320
    %v322 = vpop.f32.mrf.mxu0
    %v323 = vadd.f32 %v172, %v322
    %v324 = vpop.f32.mrf.mxu0
    %325 = vdwg.mxu0
    %326 = vmatprep.subr.mxu0 0.0
    %v327 = vand.u32 %v83, 4294901760
    %v328 = vsub.f32 %v83, %v327
    %329 = vmatpush1.msra.mxu0 %v328
    %330 = vmatprep.subr.mxu0 0.0
    %v331 = vand.u32 %v82, 4294901760
    %v332 = vsub.f32 %v82, %v331
    %333 = vmatpush1.msra.mxu0 %v332
    %334 = vmatprep.subr.mxu0 0.0
    %v335 = vand.u32 %v81, 4294901760
    %v336 = vsub.f32 %v81, %v335
    %337 = vmatpush1.msra.mxu0 %v336
    %338 = vmatprep.subr.mxu0 0.0
    %v339 = vand.u32 %v80, 4294901760
    %v340 = vsub.f32 %v80, %v339
    %341 = vmatpush1.msra.mxu0 %v340
    %342 = vmatprep.subr.mxu0 0.0
    %v343 = vand.u32 %v79, 4294901760
    %v344 = vsub.f32 %v79, %v343
    %345 = vmatpush1.msra.mxu0 %v344
    %346 = vmatprep.subr.mxu0 0.0
    %v347 = vand.u32 %v78, 4294901760
    %v348 = vsub.f32 %v78, %v347
    %349 = vmatpush1.msra.mxu0 %v348
    %350 = vmatprep.subr.mxu0 0.0
    %v351 = vand.u32 %v77, 4294901760
    %v352 = vsub.f32 %v77, %v351
    %353 = vmatpush1.msra.mxu0 %v352
    %354 = vmatprep.subr.mxu0 0.0
    %v355 = vand.u32 %v76, 4294901760
    %v356 = vsub.f32 %v76, %v355
    %357 = vmatpush1.msra.mxu0 %v356
    %358 = vmatprep.subr.mxu0 0.0
    %v359 = vand.u32 %v75, 4294901760
    %v360 = vsub.f32 %v75, %v359
    %361 = vmatpush1.msra.mxu0 %v360
    %362 = vmatprep.subr.mxu0 0.0
    %v363 = vand.u32 %v74, 4294901760
    %v364 = vsub.f32 %v74, %v363
    %365 = vmatpush1.msra.mxu0 %v364
    %366 = vmatprep.subr.mxu0 0.0
    %v367 = vand.u32 %v73, 4294901760
    %v368 = vsub.f32 %v73, %v367
    %369 = vmatpush1.msra.mxu0 %v368
    %370 = vmatprep.subr.mxu0 0.0
    %v371 = vand.u32 %v72, 4294901760
    %v372 = vsub.f32 %v72, %v371
    %373 = vmatpush1.msra.mxu0 %v372
    %374 = vmatprep.subr.mxu0 0.0
    %v375 = vand.u32 %v71, 4294901760
    %v376 = vsub.f32 %v71, %v375
    %377 = vmatpush1.msra.mxu0 %v376
    %378 = vmatprep.subr.mxu0 0.0
    %v379 = vand.u32 %v70, 4294901760
    %v380 = vsub.f32 %v70, %v379
    %381 = vmatpush1.msra.mxu0 %v380
    %382 = vmatprep.subr.mxu0 0.0
    %v383 = vand.u32 %v69, 4294901760
    %v384 = vsub.f32 %v69, %v383
    %385 = vmatpush1.msra.mxu0 %v384
    %386 = vmatprep.subr.mxu0 0.0
    %v387 = vand.u32 %v68, 4294901760
    %v388 = vsub.f32 %v68, %v387
    %389 = vmatpush1.msra.mxu0 %v388
    %390 = vmatprep.subr.mxu0 0.0
    %391 = vmatpush2.msra.mxu0 0.0
    %392 = vmatprep.subr.mxu0 0.0
    %393 = vmatpush2.msra.mxu0 0.0
    %394 = vmatprep.subr.mxu0 0.0
    %395 = vmatpush2.msra.mxu0 0.0
    %396 = vmatprep.subr.mxu0 0.0
    %397 = vmatpush2.msra.mxu0 0.0
    %398 = vmatprep.subr.mxu0 0.0
    %399 = vmatpush2.msra.mxu0 0.0
    %400 = vmatprep.subr.mxu0 0.0
    %401 = vmatpush2.msra.mxu0 0.0
    %402 = vmatprep.subr.mxu0 0.0
    %403 = vmatpush2.msra.mxu0 0.0
    %404 = vmatprep.subr.mxu0 0.0
    %405 = vmatpush2.msra.mxu0 0.0
    %406 = vmatprep.subr.mxu0 0.0
    %407 = vmatpush2.msra.mxu0 0.0
    %408 = vmatprep.subr.mxu0 0.0
    %409 = vmatpush2.msra.mxu0 0.0
    %410 = vmatprep.subr.mxu0 0.0
    %411 = vmatpush2.msra.mxu0 0.0
    %412 = vmatprep.subr.mxu0 0.0
    %413 = vmatpush2.msra.mxu0 0.0
    %414 = vmatprep.subr.mxu0 0.0
    %415 = vmatpush2.msra.mxu0 0.0
    %416 = vmatprep.subr.mxu0 0.0
    %417 = vmatpush2.msra.mxu0 0.0
    %418 = vmatprep.subr.mxu0 0.0
    %419 = vmatpush2.msra.mxu0 0.0
    %420 = vmatprep.subr.mxu0 0.0
    %421 = vmatpush2.msra.mxu0 0.0
    %422 = vmatprep.mubr.f32.mxu0 0.0
    %v423 = vand.u32 %v67, 4294901760
    %v424 = vsub.f32 %v67, %v423
    %425 = vmatmul.mubr.f32.gmra.mxu0 %v424
    %v426 = vpop.f32.mrf.mxu0
    %v427 = vadd.f32 %v323, %v426
    %v428 = vpop.f32.mrf.mxu0
    %429 = vdwg.mxu0
    %430 = vmatprep.subr.mxu0 0.0
    %v431 = vand.u32 %v83, 4294901760
    %432 = vmatpush1.msra.mxu0 %v431
    %433 = vmatprep.subr.mxu0 0.0
    %v434 = vand.u32 %v82, 4294901760
    %435 = vmatpush1.msra.mxu0 %v434
    %436 = vmatprep.subr.mxu0 0.0
    %v437 = vand.u32 %v81, 4294901760
    %438 = vmatpush1.msra.mxu0 %v437
    %439 = vmatprep.subr.mxu0 0.0
    %v440 = vand.u32 %v80, 4294901760
    %441 = vmatpush1.msra.mxu0 %v440
    %442 = vmatprep.subr.mxu0 0.0
    %v443 = vand.u32 %v79, 4294901760
    %444 = vmatpush1.msra.mxu0 %v443
    %445 = vmatprep.subr.mxu0 0.0
    %v446 = vand.u32 %v78, 4294901760
    %447 = vmatpush1.msra.mxu0 %v446
    %448 = vmatprep.subr.mxu0 0.0
    %v449 = vand.u32 %v77, 4294901760
    %450 = vmatpush1.msra.mxu0 %v449
    %451 = vmatprep.subr.mxu0 0.0
    %v452 = vand.u32 %v76, 4294901760
    %453 = vmatpush1.msra.mxu0 %v452
    %454 = vmatprep.subr.mxu0 0.0
    %v455 = vand.u32 %v75, 4294901760
    %456 = vmatpush1.msra.mxu0 %v455
    %457 = vmatprep.subr.mxu0 0.0
    %v458 = vand.u32 %v74, 4294901760
    %459 = vmatpush1.msra.mxu0 %v458
    %460 = vmatprep.subr.mxu0 0.0
    %v461 = vand.u32 %v73, 4294901760
    %462 = vmatpush1.msra.mxu0 %v461
    %463 = vmatprep.subr.mxu0 0.0
    %v464 = vand.u32 %v72, 4294901760
    %465 = vmatpush1.msra.mxu0 %v464
    %466 = vmatprep.subr.mxu0 0.0
    %v467 = vand.u32 %v71, 4294901760
    %468 = vmatpush1.msra.mxu0 %v467
    %469 = vmatprep.subr.mxu0 0.0
    %v470 = vand.u32 %v70, 4294901760
    %471 = vmatpush1.msra.mxu0 %v470
    %472 = vmatprep.subr.mxu0 0.0
    %v473 = vand.u32 %v69, 4294901760
    %474 = vmatpush1.msra.mxu0 %v473
    %475 = vmatprep.subr.mxu0 0.0
    %v476 = vand.u32 %v68, 4294901760
    %477 = vmatpush1.msra.mxu0 %v476
    %478 = vmatprep.subr.mxu0 0.0
    %479 = vmatpush2.msra.mxu0 0.0
    %480 = vmatprep.subr.mxu0 0.0
    %481 = vmatpush2.msra.mxu0 0.0
    %482 = vmatprep.subr.mxu0 0.0
    %483 = vmatpush2.msra.mxu0 0.0
    %484 = vmatprep.subr.mxu0 0.0
    %485 = vmatpush2.msra.mxu0 0.0
    %486 = vmatprep.subr.mxu0 0.0
    %487 = vmatpush2.msra.mxu0 0.0
    %488 = vmatprep.subr.mxu0 0.0
    %489 = vmatpush2.msra.mxu0 0.0
    %490 = vmatprep.subr.mxu0 0.0
    %491 = vmatpush2.msra.mxu0 0.0
    %492 = vmatprep.subr.mxu0 0.0
    %493 = vmatpush2.msra.mxu0 0.0
    %494 = vmatprep.subr.mxu0 0.0
    %495 = vmatpush2.msra.mxu0 0.0
    %496 = vmatprep.subr.mxu0 0.0
    %497 = vmatpush2.msra.mxu0 0.0
    %498 = vmatprep.subr.mxu0 0.0
    %499 = vmatpush2.msra.mxu0 0.0
    %500 = vmatprep.subr.mxu0 0.0
    %501 = vmatpush2.msra.mxu0 0.0
    %502 = vmatprep.subr.mxu0 0.0
    %503 = vmatpush2.msra.mxu0 0.0
    %504 = vmatprep.subr.mxu0 0.0
    %505 = vmatpush2.msra.mxu0 0.0
    %506 = vmatprep.subr.mxu0 0.0
    %507 = vmatpush2.msra.mxu0 0.0
    %508 = vmatprep.subr.mxu0 0.0
    %509 = vmatpush2.msra.mxu0 0.0
    %510 = vmatprep.mubr.f32.mxu0 0.0
    %v511 = vand.u32 %v67, 4294901760
    %v512 = vsub.f32 %v67, %v511
    %v513 = vand.u32 %v512, 4294901760
    %514 = vmatmul.mubr.f32.gmra.mxu0 %v513
    %v515 = vpop.f32.mrf.mxu0
    %v516 = vadd.f32 %v427, %v515
    %v517 = vpop.f32.mrf.mxu0
    %518 = vdwg.mxu0
    %519 = vmatprep.subr.mxu0 0.0
    %v520 = vand.u32 %v83, 4294901760
    %v521 = vsub.f32 %v83, %v520
    %v522 = vand.u32 %v521, 4294901760
    %523 = vmatpush1.msra.mxu0 %v522
    %524 = vmatprep.subr.mxu0 0.0
    %v525 = vand.u32 %v82, 4294901760
    %v526 = vsub.f32 %v82, %v525
    %v527 = vand.u32 %v526, 4294901760
    %528 = vmatpush1.msra.mxu0 %v527
    %529 = vmatprep.subr.mxu0 0.0
    %v530 = vand.u32 %v81, 4294901760
    %v531 = vsub.f32 %v81, %v530
    %v532 = vand.u32 %v531, 4294901760
    %533 = vmatpush1.msra.mxu0 %v532
    %534 = vmatprep.subr.mxu0 0.0
    %v535 = vand.u32 %v80, 4294901760
    %v536 = vsub.f32 %v80, %v535
    %v537 = vand.u32 %v536, 4294901760
    %538 = vmatpush1.msra.mxu0 %v537
    %539 = vmatprep.subr.mxu0 0.0
    %v540 = vand.u32 %v79, 4294901760
    %v541 = vsub.f32 %v79, %v540
    %v542 = vand.u32 %v541, 4294901760
    %543 = vmatpush1.msra.mxu0 %v542
    %544 = vmatprep.subr.mxu0 0.0
    %v545 = vand.u32 %v78, 4294901760
    %v546 = vsub.f32 %v78, %v545
    %v547 = vand.u32 %v546, 4294901760
    %548 = vmatpush1.msra.mxu0 %v547
    %549 = vmatprep.subr.mxu0 0.0
    %v550 = vand.u32 %v77, 4294901760
    %v551 = vsub.f32 %v77, %v550
    %v552 = vand.u32 %v551, 4294901760
    %553 = vmatpush1.msra.mxu0 %v552
    %554 = vmatprep.subr.mxu0 0.0
    %v555 = vand.u32 %v76, 4294901760
    %v556 = vsub.f32 %v76, %v555
    %v557 = vand.u32 %v556, 4294901760
    %558 = vmatpush1.msra.mxu0 %v557
    %559 = vmatprep.subr.mxu0 0.0
    %v560 = vand.u32 %v75, 4294901760
    %v561 = vsub.f32 %v75, %v560
    %v562 = vand.u32 %v561, 4294901760
    %563 = vmatpush1.msra.mxu0 %v562
    %564 = vmatprep.subr.mxu0 0.0
    %v565 = vand.u32 %v74, 4294901760
    %v566 = vsub.f32 %v74, %v565
    %v567 = vand.u32 %v566, 4294901760
    %568 = vmatpush1.msra.mxu0 %v567
    %569 = vmatprep.subr.mxu0 0.0
    %v570 = vand.u32 %v73, 4294901760
    %v571 = vsub.f32 %v73, %v570
    %v572 = vand.u32 %v571, 4294901760
    %573 = vmatpush1.msra.mxu0 %v572
    %574 = vmatprep.subr.mxu0 0.0
    %v575 = vand.u32 %v72, 4294901760
    %v576 = vsub.f32 %v72, %v575
    %v577 = vand.u32 %v576, 4294901760
    %578 = vmatpush1.msra.mxu0 %v577
    %579 = vmatprep.subr.mxu0 0.0
    %v580 = vand.u32 %v71, 4294901760
    %v581 = vsub.f32 %v71, %v580
    %v582 = vand.u32 %v581, 4294901760
    %583 = vmatpush1.msra.mxu0 %v582
    %584 = vmatprep.subr.mxu0 0.0
    %v585 = vand.u32 %v70, 4294901760
    %v586 = vsub.f32 %v70, %v585
    %v587 = vand.u32 %v586, 4294901760
    %588 = vmatpush1.msra.mxu0 %v587
    %589 = vmatprep.subr.mxu0 0.0
    %v590 = vand.u32 %v69, 4294901760
    %v591 = vsub.f32 %v69, %v590
    %v592 = vand.u32 %v591, 4294901760
    %593 = vmatpush1.msra.mxu0 %v592
    %594 = vmatprep.subr.mxu0 0.0
    %v595 = vand.u32 %v68, 4294901760
    %v596 = vsub.f32 %v68, %v595
    %v597 = vand.u32 %v596, 4294901760
    %598 = vmatpush1.msra.mxu0 %v597
    %599 = vmatprep.subr.mxu0 0.0
    %600 = vmatpush2.msra.mxu0 0.0
    %601 = vmatprep.subr.mxu0 0.0
    %602 = vmatpush2.msra.mxu0 0.0
    %603 = vmatprep.subr.mxu0 0.0
    %604 = vmatpush2.msra.mxu0 0.0
    %605 = vmatprep.subr.mxu0 0.0
    %606 = vmatpush2.msra.mxu0 0.0
    %607 = vmatprep.subr.mxu0 0.0
    %608 = vmatpush2.msra.mxu0 0.0
    %609 = vmatprep.subr.mxu0 0.0
    %610 = vmatpush2.msra.mxu0 0.0
    %611 = vmatprep.subr.mxu0 0.0
    %612 = vmatpush2.msra.mxu0 0.0
    %613 = vmatprep.subr.mxu0 0.0
    %614 = vmatpush2.msra.mxu0 0.0
    %615 = vmatprep.subr.mxu0 0.0
    %616 = vmatpush2.msra.mxu0 0.0
    %617 = vmatprep.subr.mxu0 0.0
    %618 = vmatpush2.msra.mxu0 0.0
    %619 = vmatprep.subr.mxu0 0.0
    %620 = vmatpush2.msra.mxu0 0.0
    %621 = vmatprep.subr.mxu0 0.0
    %622 = vmatpush2.msra.mxu0 0.0
    %623 = vmatprep.subr.mxu0 0.0
    %624 = vmatpush2.msra.mxu0 0.0
    %625 = vmatprep.subr.mxu0 0.0
    %626 = vmatpush2.msra.mxu0 0.0
    %627 = vmatprep.subr.mxu0 0.0
    %628 = vmatpush2.msra.mxu0 0.0
    %629 = vmatprep.subr.mxu0 0.0
    %630 = vmatpush2.msra.mxu0 0.0
    %631 = vmatprep.mubr.f32.mxu0 0.0
    %v632 = vand.u32 %v67, 4294901760
    %633 = vmatmul.mubr.f32.gmra.mxu0 %v632
    %v634 = vpop.f32.mrf.mxu0
    %v635 = vadd.f32 %v516, %v634
    %v636 = vpop.f32.mrf.mxu0
    %637 = vdwg.mxu0
    %638 = vmatprep.subr.mxu0 0.0
    %v639 = vand.u32 %v83, 4294901760
    %640 = vmatpush1.msra.mxu0 %v639
    %641 = vmatprep.subr.mxu0 0.0
    %v642 = vand.u32 %v82, 4294901760
    %643 = vmatpush1.msra.mxu0 %v642
    %644 = vmatprep.subr.mxu0 0.0
    %v645 = vand.u32 %v81, 4294901760
    %646 = vmatpush1.msra.mxu0 %v645
    %647 = vmatprep.subr.mxu0 0.0
    %v648 = vand.u32 %v80, 4294901760
    %649 = vmatpush1.msra.mxu0 %v648
    %650 = vmatprep.subr.mxu0 0.0
    %v651 = vand.u32 %v79, 4294901760
    %652 = vmatpush1.msra.mxu0 %v651
    %653 = vmatprep.subr.mxu0 0.0
    %v654 = vand.u32 %v78, 4294901760
    %655 = vmatpush1.msra.mxu0 %v654
    %656 = vmatprep.subr.mxu0 0.0
    %v657 = vand.u32 %v77, 4294901760
    %658 = vmatpush1.msra.mxu0 %v657
    %659 = vmatprep.subr.mxu0 0.0
    %v660 = vand.u32 %v76, 4294901760
    %661 = vmatpush1.msra.mxu0 %v660
    %662 = vmatprep.subr.mxu0 0.0
    %v663 = vand.u32 %v75, 4294901760
    %664 = vmatpush1.msra.mxu0 %v663
    %665 = vmatprep.subr.mxu0 0.0
    %v666 = vand.u32 %v74, 4294901760
    %667 = vmatpush1.msra.mxu0 %v666
    %668 = vmatprep.subr.mxu0 0.0
    %v669 = vand.u32 %v73, 4294901760
    %670 = vmatpush1.msra.mxu0 %v669
    %671 = vmatprep.subr.mxu0 0.0
    %v672 = vand.u32 %v72, 4294901760
    %673 = vmatpush1.msra.mxu0 %v672
    %674 = vmatprep.subr.mxu0 0.0
    %v675 = vand.u32 %v71, 4294901760
    %676 = vmatpush1.msra.mxu0 %v675
    %677 = vmatprep.subr.mxu0 0.0
    %v678 = vand.u32 %v70, 4294901760
    %679 = vmatpush1.msra.mxu0 %v678
    %680 = vmatprep.subr.mxu0 0.0
    %v681 = vand.u32 %v69, 4294901760
    %682 = vmatpush1.msra.mxu0 %v681
    %683 = vmatprep.subr.mxu0 0.0
    %v684 = vand.u32 %v68, 4294901760
    %685 = vmatpush1.msra.mxu0 %v684
    %686 = vmatprep.subr.mxu0 0.0
    %687 = vmatpush2.msra.mxu0 0.0
    %688 = vmatprep.subr.mxu0 0.0
    %689 = vmatpush2.msra.mxu0 0.0
    %690 = vmatprep.subr.mxu0 0.0
    %691 = vmatpush2.msra.mxu0 0.0
    %692 = vmatprep.subr.mxu0 0.0
    %693 = vmatpush2.msra.mxu0 0.0
    %694 = vmatprep.subr.mxu0 0.0
    %695 = vmatpush2.msra.mxu0 0.0
    %696 = vmatprep.subr.mxu0 0.0
    %697 = vmatpush2.msra.mxu0 0.0
    %698 = vmatprep.subr.mxu0 0.0
    %699 = vmatpush2.msra.mxu0 0.0
    %700 = vmatprep.subr.mxu0 0.0
    %701 = vmatpush2.msra.mxu0 0.0
    %702 = vmatprep.subr.mxu0 0.0
    %703 = vmatpush2.msra.mxu0 0.0
    %704 = vmatprep.subr.mxu0 0.0
    %705 = vmatpush2.msra.mxu0 0.0
    %706 = vmatprep.subr.mxu0 0.0
    %707 = vmatpush2.msra.mxu0 0.0
    %708 = vmatprep.subr.mxu0 0.0
    %709 = vmatpush2.msra.mxu0 0.0
    %710 = vmatprep.subr.mxu0 0.0
    %711 = vmatpush2.msra.mxu0 0.0
    %712 = vmatprep.subr.mxu0 0.0
    %713 = vmatpush2.msra.mxu0 0.0
    %714 = vmatprep.subr.mxu0 0.0
    %715 = vmatpush2.msra.mxu0 0.0
    %716 = vmatprep.subr.mxu0 0.0
    %717 = vmatpush2.msra.mxu0 0.0
    %718 = vmatprep.mubr.f32.mxu0 0.0
    %v719 = vand.u32 %v67, 4294901760
    %720 = vmatmul.mubr.f32.gmra.mxu0 %v719
    %v721 = vpop.f32.mrf.mxu0
    %v722 = vadd.f32 %v635, %v721
    %v723 = vpop.f32.mrf.mxu0
    %724 = vdwg.mxu0
    %v725 = vmul.f32 %v67, %v722
    %v726 = vadd.f32 %v725, %v67
    %s727 = scalar_lea.vmem [#allocation5], 128
    %v728 = vld [vmem:[%s727] sm:$0xff]
    %v729 = vld [vmem:[%s727 + $0x8] sm:$0xff]
    %v730 = vld [vmem:[%s727 + $0x10] sm:$0xff]
    %v731 = vld [vmem:[%s727 + $0x18] sm:$0xff]
    %v732 = vld [vmem:[%s727 + $0x20] sm:$0xff]
    %v733 = vld [vmem:[%s727 + $0x28] sm:$0xff]
    %v734 = vld [vmem:[%s727 + $0x30] sm:$0xff]
    %v735 = vld [vmem:[%s727 + $0x38] sm:$0xff]
    %v736 = vld [vmem:[%s727 + $0x40] sm:$0xff]
    %v737 = vld [vmem:[%s727 + $0x48] sm:$0xff]
    %v738 = vld [vmem:[%s727 + $0x50] sm:$0xff]
    %v739 = vld [vmem:[%s727 + $0x58] sm:$0xff]
    %v740 = vld [vmem:[%s727 + $0x60] sm:$0xff]
    %v741 = vld [vmem:[%s727 + $0x68] sm:$0xff]
    %v742 = vld [vmem:[%s727 + $0x70] sm:$0xff]
    %v743 = vld [vmem:[%s727 + $0x78] sm:$0xff]
    %744 = vmatprep.subr.mxu0 0.0
    %v745 = vand.u32 %v743, 4294901760
    %746 = vmatpush1.msra.mxu0 %v745
    %747 = vmatprep.subr.mxu0 0.0
    %v748 = vand.u32 %v742, 4294901760
    %749 = vmatpush1.msra.mxu0 %v748
    %750 = vmatprep.subr.mxu0 0.0
    %v751 = vand.u32 %v741, 4294901760
    %752 = vmatpush1.msra.mxu0 %v751
    %753 = vmatprep.subr.mxu0 0.0
    %v754 = vand.u32 %v740, 4294901760
    %755 = vmatpush1.msra.mxu0 %v754
    %756 = vmatprep.subr.mxu0 0.0
    %v757 = vand.u32 %v739, 4294901760
    %758 = vmatpush1.msra.mxu0 %v757
    %759 = vmatprep.subr.mxu0 0.0
    %v760 = vand.u32 %v738, 4294901760
    %761 = vmatpush1.msra.mxu0 %v760
    %762 = vmatprep.subr.mxu0 0.0
    %v763 = vand.u32 %v737, 4294901760
    %764 = vmatpush1.msra.mxu0 %v763
    %765 = vmatprep.subr.mxu0 0.0
    %v766 = vand.u32 %v736, 4294901760
    %767 = vmatpush1.msra.mxu0 %v766
    %768 = vmatprep.subr.mxu0 0.0
    %v769 = vand.u32 %v735, 4294901760
    %770 = vmatpush1.msra.mxu0 %v769
    %771 = vmatprep.subr.mxu0 0.0
    %v772 = vand.u32 %v734, 4294901760
    %773 = vmatpush1.msra.mxu0 %v772
    %774 = vmatprep.subr.mxu0 0.0
    %v775 = vand.u32 %v733, 4294901760
    %776 = vmatpush1.msra.mxu0 %v775
    %777 = vmatprep.subr.mxu0 0.0
    %v778 = vand.u32 %v732, 4294901760
    %779 = vmatpush1.msra.mxu0 %v778
    %780 = vmatprep.subr.mxu0 0.0
    %v781 = vand.u32 %v731, 4294901760
    %782 = vmatpush1.msra.mxu0 %v781
    %783 = vmatprep.subr.mxu0 0.0
    %v784 = vand.u32 %v730, 4294901760
    %785 = vmatpush1.msra.mxu0 %v784
    %786 = vmatprep.subr.mxu0 0.0
    %v787 = vand.u32 %v729, 4294901760
    %788 = vmatpush1.msra.mxu0 %v787
    %789 = vmatprep.subr.mxu0 0.0
    %v790 = vand.u32 %v728, 4294901760
    %791 = vmatpush1.msra.mxu0 %v790
    %792 = vmatprep.subr.mxu0 0.0
    %793 = vmatpush2.msra.mxu0 0.0
    %794 = vmatprep.subr.mxu0 0.0
    %795 = vmatpush2.msra.mxu0 0.0
    %796 = vmatprep.subr.mxu0 0.0
    %797 = vmatpush2.msra.mxu0 0.0
    %798 = vmatprep.subr.mxu0 0.0
    %799 = vmatpush2.msra.mxu0 0.0
    %800 = vmatprep.subr.mxu0 0.0
    %801 = vmatpush2.msra.mxu0 0.0
    %802 = vmatprep.subr.mxu0 0.0
    %803 = vmatpush2.msra.mxu0 0.0
    %804 = vmatprep.subr.mxu0 0.0
    %805 = vmatpush2.msra.mxu0 0.0
    %806 = vmatprep.subr.mxu0 0.0
    %807 = vmatpush2.msra.mxu0 0.0
    %808 = vmatprep.subr.mxu0 0.0
    %809 = vmatpush2.msra.mxu0 0.0
    %810 = vmatprep.subr.mxu0 0.0
    %811 = vmatpush2.msra.mxu0 0.0
    %812 = vmatprep.subr.mxu0 0.0
    %813 = vmatpush2.msra.mxu0 0.0
    %814 = vmatprep.subr.mxu0 0.0
    %815 = vmatpush2.msra.mxu0 0.0
    %816 = vmatprep.subr.mxu0 0.0
    %817 = vmatpush2.msra.mxu0 0.0
    %818 = vmatprep.subr.mxu0 0.0
    %819 = vmatpush2.msra.mxu0 0.0
    %820 = vmatprep.subr.mxu0 0.0
    %821 = vmatpush2.msra.mxu0 0.0
    %822 = vmatprep.subr.mxu0 0.0
    %823 = vmatpush2.msra.mxu0 0.0
    %824 = vmatprep.mubr.f32.mxu0 0.0
    %v825 = vand.u32 %v726, 4294901760
    %v826 = vsub.f32 %v726, %v825
    %v827 = vand.u32 %v826, 4294901760
    %v828 = vsub.f32 %v826, %v827
    %v829 = vand.u32 %v828, 4294901760
    %830 = vmatmul.mubr.f32.gmra.mxu0 %v829
    %v831 = vpop.f32.mrf.mxu0
    %v832 = vadd.f32 %v61, %v831
    %v833 = vpop.f32.mrf.mxu0
    %834 = vdwg.mxu0
    %835 = vmatprep.subr.mxu0 0.0
    %v836 = vand.u32 %v743, 4294901760
    %v837 = vsub.f32 %v743, %v836
    %v838 = vand.u32 %v837, 4294901760
    %v839 = vsub.f32 %v837, %v838
    %v840 = vand.u32 %v839, 4294901760
    %841 = vmatpush1.msra.mxu0 %v840
    %842 = vmatprep.subr.mxu0 0.0
    %v843 = vand.u32 %v742, 4294901760
    %v844 = vsub.f32 %v742, %v843
    %v845 = vand.u32 %v844, 4294901760
    %v846 = vsub.f32 %v844, %v845
    %v847 = vand.u32 %v846, 4294901760
    %848 = vmatpush1.msra.mxu0 %v847
    %849 = vmatprep.subr.mxu0 0.0
    %v850 = vand.u32 %v741, 4294901760
    %v851 = vsub.f32 %v741, %v850
    %v852 = vand.u32 %v851, 4294901760
    %v853 = vsub.f32 %v851, %v852
    %v854 = vand.u32 %v853, 4294901760
    %855 = vmatpush1.msra.mxu0 %v854
    %856 = vmatprep.subr.mxu0 0.0
    %v857 = vand.u32 %v740, 4294901760
    %v858 = vsub.f32 %v740, %v857
    %v859 = vand.u32 %v858, 4294901760
    %v860 = vsub.f32 %v858, %v859
    %v861 = vand.u32 %v860, 4294901760
    %862 = vmatpush1.msra.mxu0 %v861
    %863 = vmatprep.subr.mxu0 0.0
    %v864 = vand.u32 %v739, 4294901760
    %v865 = vsub.f32 %v739, %v864
    %v866 = vand.u32 %v865, 4294901760
    %v867 = vsub.f32 %v865, %v866
    %v868 = vand.u32 %v867, 4294901760
    %869 = vmatpush1.msra.mxu0 %v868
    %870 = vmatprep.subr.mxu0 0.0
    %v871 = vand.u32 %v738, 4294901760
    %v872 = vsub.f32 %v738, %v871
    %v873 = vand.u32 %v872, 4294901760
    %v874 = vsub.f32 %v872, %v873
    %v875 = vand.u32 %v874, 4294901760
    %876 = vmatpush1.msra.mxu0 %v875
    %877 = vmatprep.subr.mxu0 0.0
    %v878 = vand.u32 %v737, 4294901760
    %v879 = vsub.f32 %v737, %v878
    %v880 = vand.u32 %v879, 4294901760
    %v881 = vsub.f32 %v879, %v880
    %v882 = vand.u32 %v881, 4294901760
    %883 = vmatpush1.msra.mxu0 %v882
    %884 = vmatprep.subr.mxu0 0.0
    %v885 = vand.u32 %v736, 4294901760
    %v886 = vsub.f32 %v736, %v885
    %v887 = vand.u32 %v886, 4294901760
    %v888 = vsub.f32 %v886, %v887
    %v889 = vand.u32 %v888, 4294901760
    %890 = vmatpush1.msra.mxu0 %v889
    %891 = vmatprep.subr.mxu0 0.0
    %v892 = vand.u32 %v735, 4294901760
    %v893 = vsub.f32 %v735, %v892
    %v894 = vand.u32 %v893, 4294901760
    %v895 = vsub.f32 %v893, %v894
    %v896 = vand.u32 %v895, 4294901760
    %897 = vmatpush1.msra.mxu0 %v896
    %898 = vmatprep.subr.mxu0 0.0
    %v899 = vand.u32 %v734, 4294901760
    %v900 = vsub.f32 %v734, %v899
    %v901 = vand.u32 %v900, 4294901760
    %v902 = vsub.f32 %v900, %v901
    %v903 = vand.u32 %v902, 4294901760
    %904 = vmatpush1.msra.mxu0 %v903
    %905 = vmatprep.subr.mxu0 0.0
    %v906 = vand.u32 %v733, 4294901760
    %v907 = vsub.f32 %v733, %v906
    %v908 = vand.u32 %v907, 4294901760
    %v909 = vsub.f32 %v907, %v908
    %v910 = vand.u32 %v909, 4294901760
    %911 = vmatpush1.msra.mxu0 %v910
    %912 = vmatprep.subr.mxu0 0.0
    %v913 = vand.u32 %v732, 4294901760
    %v914 = vsub.f32 %v732, %v913
    %v915 = vand.u32 %v914, 4294901760
    %v916 = vsub.f32 %v914, %v915
    %v917 = vand.u32 %v916, 4294901760
    %918 = vmatpush1.msra.mxu0 %v917
    %919 = vmatprep.subr.mxu0 0.0
    %v920 = vand.u32 %v731, 4294901760
    %v921 = vsub.f32 %v731, %v920
    %v922 = vand.u32 %v921, 4294901760
    %v923 = vsub.f32 %v921, %v922
    %v924 = vand.u32 %v923, 4294901760
    %925 = vmatpush1.msra.mxu0 %v924
    %926 = vmatprep.subr.mxu0 0.0
    %v927 = vand.u32 %v730, 4294901760
    %v928 = vsub.f32 %v730, %v927
    %v929 = vand.u32 %v928, 4294901760
    %v930 = vsub.f32 %v928, %v929
    %v931 = vand.u32 %v930, 4294901760
    %932 = vmatpush1.msra.mxu0 %v931
    %933 = vmatprep.subr.mxu0 0.0
    %v934 = vand.u32 %v729, 4294901760
    %v935 = vsub.f32 %v729, %v934
    %v936 = vand.u32 %v935, 4294901760
    %v937 = vsub.f32 %v935, %v936
    %v938 = vand.u32 %v937, 4294901760
    %939 = vmatpush1.msra.mxu0 %v938
    %940 = vmatprep.subr.mxu0 0.0
    %v941 = vand.u32 %v728, 4294901760
    %v942 = vsub.f32 %v728, %v941
    %v943 = vand.u32 %v942, 4294901760
    %v944 = vsub.f32 %v942, %v943
    %v945 = vand.u32 %v944, 4294901760
    %946 = vmatpush1.msra.mxu0 %v945
    %947 = vmatprep.subr.mxu0 0.0
    %948 = vmatpush2.msra.mxu0 0.0
    %949 = vmatprep.subr.mxu0 0.0
    %950 = vmatpush2.msra.mxu0 0.0
    %951 = vmatprep.subr.mxu0 0.0
    %952 = vmatpush2.msra.mxu0 0.0
    %953 = vmatprep.subr.mxu0 0.0
    %954 = vmatpush2.msra.mxu0 0.0
    %955 = vmatprep.subr.mxu0 0.0
    %956 = vmatpush2.msra.mxu0 0.0
    %957 = vmatprep.subr.mxu0 0.0
    %958 = vmatpush2.msra.mxu0 0.0
    %959 = vmatprep.subr.mxu0 0.0
    %960 = vmatpush2.msra.mxu0 0.0
    %961 = vmatprep.subr.mxu0 0.0
    %962 = vmatpush2.msra.mxu0 0.0
    %963 = vmatprep.subr.mxu0 0.0
    %964 = vmatpush2.msra.mxu0 0.0
    %965 = vmatprep.subr.mxu0 0.0
    %966 = vmatpush2.msra.mxu0 0.0
    %967 = vmatprep.subr.mxu0 0.0
    %968 = vmatpush2.msra.mxu0 0.0
    %969 = vmatprep.subr.mxu0 0.0
    %970 = vmatpush2.msra.mxu0 0.0
    %971 = vmatprep.subr.mxu0 0.0
    %972 = vmatpush2.msra.mxu0 0.0
    %973 = vmatprep.subr.mxu0 0.0
    %974 = vmatpush2.msra.mxu0 0.0
    %975 = vmatprep.subr.mxu0 0.0
    %976 = vmatpush2.msra.mxu0 0.0
    %977 = vmatprep.subr.mxu0 0.0
    %978 = vmatpush2.msra.mxu0 0.0
    %979 = vmatprep.mubr.f32.mxu0 0.0
    %v980 = vand.u32 %v726, 4294901760
    %981 = vmatmul.mubr.f32.gmra.mxu0 %v980
    %v982 = vpop.f32.mrf.mxu0
    %v983 = vadd.f32 %v832, %v982
    %v984 = vpop.f32.mrf.mxu0
    %985 = vdwg.mxu0
    %986 = vmatprep.subr.mxu0 0.0
    %v987 = vand.u32 %v743, 4294901760
    %v988 = vsub.f32 %v743, %v987
    %989 = vmatpush1.msra.mxu0 %v988
    %990 = vmatprep.subr.mxu0 0.0
    %v991 = vand.u32 %v742, 4294901760
    %v992 = vsub.f32 %v742, %v991
    %993 = vmatpush1.msra.mxu0 %v992
    %994 = vmatprep.subr.mxu0 0.0
    %v995 = vand.u32 %v741, 4294901760
    %v996 = vsub.f32 %v741, %v995
    %997 = vmatpush1.msra.mxu0 %v996
    %998 = vmatprep.subr.mxu0 0.0
    %v999 = vand.u32 %v740, 4294901760
    %v1000 = vsub.f32 %v740, %v999
    %1001 = vmatpush1.msra.mxu0 %v1000
    %1002 = vmatprep.subr.mxu0 0.0
    %v1003 = vand.u32 %v739, 4294901760
    %v1004 = vsub.f32 %v739, %v1003
    %1005 = vmatpush1.msra.mxu0 %v1004
    %1006 = vmatprep.subr.mxu0 0.0
    %v1007 = vand.u32 %v738, 4294901760
    %v1008 = vsub.f32 %v738, %v1007
    %1009 = vmatpush1.msra.mxu0 %v1008
    %1010 = vmatprep.subr.mxu0 0.0
    %v1011 = vand.u32 %v737, 4294901760
    %v1012 = vsub.f32 %v737, %v1011
    %1013 = vmatpush1.msra.mxu0 %v1012
    %1014 = vmatprep.subr.mxu0 0.0
    %v1015 = vand.u32 %v736, 4294901760
    %v1016 = vsub.f32 %v736, %v1015
    %1017 = vmatpush1.msra.mxu0 %v1016
    %1018 = vmatprep.subr.mxu0 0.0
    %v1019 = vand.u32 %v735, 4294901760
    %v1020 = vsub.f32 %v735, %v1019
    %1021 = vmatpush1.msra.mxu0 %v1020
    %1022 = vmatprep.subr.mxu0 0.0
    %v1023 = vand.u32 %v734, 4294901760
    %v1024 = vsub.f32 %v734, %v1023
    %1025 = vmatpush1.msra.mxu0 %v1024
    %1026 = vmatprep.subr.mxu0 0.0
    %v1027 = vand.u32 %v733, 4294901760
    %v1028 = vsub.f32 %v733, %v1027
    %1029 = vmatpush1.msra.mxu0 %v1028
    %1030 = vmatprep.subr.mxu0 0.0
    %v1031 = vand.u32 %v732, 4294901760
    %v1032 = vsub.f32 %v732, %v1031
    %1033 = vmatpush1.msra.mxu0 %v1032
    %1034 = vmatprep.subr.mxu0 0.0
    %v1035 = vand.u32 %v731, 4294901760
    %v1036 = vsub.f32 %v731, %v1035
    %1037 = vmatpush1.msra.mxu0 %v1036
    %1038 = vmatprep.subr.mxu0 0.0
    %v1039 = vand.u32 %v730, 4294901760
    %v1040 = vsub.f32 %v730, %v1039
    %1041 = vmatpush1.msra.mxu0 %v1040
    %1042 = vmatprep.subr.mxu0 0.0
    %v1043 = vand.u32 %v729, 4294901760
    %v1044 = vsub.f32 %v729, %v1043
    %1045 = vmatpush1.msra.mxu0 %v1044
    %1046 = vmatprep.subr.mxu0 0.0
    %v1047 = vand.u32 %v728, 4294901760
    %v1048 = vsub.f32 %v728, %v1047
    %1049 = vmatpush1.msra.mxu0 %v1048
    %1050 = vmatprep.subr.mxu0 0.0
    %1051 = vmatpush2.msra.mxu0 0.0
    %1052 = vmatprep.subr.mxu0 0.0
    %1053 = vmatpush2.msra.mxu0 0.0
    %1054 = vmatprep.subr.mxu0 0.0
    %1055 = vmatpush2.msra.mxu0 0.0
    %1056 = vmatprep.subr.mxu0 0.0
    %1057 = vmatpush2.msra.mxu0 0.0
    %1058 = vmatprep.subr.mxu0 0.0
    %1059 = vmatpush2.msra.mxu0 0.0
    %1060 = vmatprep.subr.mxu0 0.0
    %1061 = vmatpush2.msra.mxu0 0.0
    %1062 = vmatprep.subr.mxu0 0.0
    %1063 = vmatpush2.msra.mxu0 0.0
    %1064 = vmatprep.subr.mxu0 0.0
    %1065 = vmatpush2.msra.mxu0 0.0
    %1066 = vmatprep.subr.mxu0 0.0
    %1067 = vmatpush2.msra.mxu0 0.0
    %1068 = vmatprep.subr.mxu0 0.0
    %1069 = vmatpush2.msra.mxu0 0.0
    %1070 = vmatprep.subr.mxu0 0.0
    %1071 = vmatpush2.msra.mxu0 0.0
    %1072 = vmatprep.subr.mxu0 0.0
    %1073 = vmatpush2.msra.mxu0 0.0
    %1074 = vmatprep.subr.mxu0 0.0
    %1075 = vmatpush2.msra.mxu0 0.0
    %1076 = vmatprep.subr.mxu0 0.0
    %1077 = vmatpush2.msra.mxu0 0.0
    %1078 = vmatprep.subr.mxu0 0.0
    %1079 = vmatpush2.msra.mxu0 0.0
    %1080 = vmatprep.subr.mxu0 0.0
    %1081 = vmatpush2.msra.mxu0 0.0
    %1082 = vmatprep.mubr.f32.mxu0 0.0
    %v1083 = vand.u32 %v726, 4294901760
    %v1084 = vsub.f32 %v726, %v1083
    %1085 = vmatmul.mubr.f32.gmra.mxu0 %v1084
    %v1086 = vpop.f32.mrf.mxu0
    %v1087 = vadd.f32 %v983, %v1086
    %v1088 = vpop.f32.mrf.mxu0
    %1089 = vdwg.mxu0
    %1090 = vmatprep.subr.mxu0 0.0
    %v1091 = vand.u32 %v743, 4294901760
    %1092 = vmatpush1.msra.mxu0 %v1091
    %1093 = vmatprep.subr.mxu0 0.0
    %v1094 = vand.u32 %v742, 4294901760
    %1095 = vmatpush1.msra.mxu0 %v1094
    %1096 = vmatprep.subr.mxu0 0.0
    %v1097 = vand.u32 %v741, 4294901760
    %1098 = vmatpush1.msra.mxu0 %v1097
    %1099 = vmatprep.subr.mxu0 0.0
    %v1100 = vand.u32 %v740, 4294901760
    %1101 = vmatpush1.msra.mxu0 %v1100
    %1102 = vmatprep.subr.mxu0 0.0
    %v1103 = vand.u32 %v739, 4294901760
    %1104 = vmatpush1.msra.mxu0 %v1103
    %1105 = vmatprep.subr.mxu0 0.0
    %v1106 = vand.u32 %v738, 4294901760
    %1107 = vmatpush1.msra.mxu0 %v1106
    %1108 = vmatprep.subr.mxu0 0.0
    %v1109 = vand.u32 %v737, 4294901760
    %1110 = vmatpush1.msra.mxu0 %v1109
    %1111 = vmatprep.subr.mxu0 0.0
    %v1112 = vand.u32 %v736, 4294901760
    %1113 = vmatpush1.msra.mxu0 %v1112
    %1114 = vmatprep.subr.mxu0 0.0
    %v1115 = vand.u32 %v735, 4294901760
    %1116 = vmatpush1.msra.mxu0 %v1115
    %1117 = vmatprep.subr.mxu0 0.0
    %v1118 = vand.u32 %v734, 4294901760
    %1119 = vmatpush1.msra.mxu0 %v1118
    %1120 = vmatprep.subr.mxu0 0.0
    %v1121 = vand.u32 %v733, 4294901760
    %1122 = vmatpush1.msra.mxu0 %v1121
    %1123 = vmatprep.subr.mxu0 0.0
    %v1124 = vand.u32 %v732, 4294901760
    %1125 = vmatpush1.msra.mxu0 %v1124
    %1126 = vmatprep.subr.mxu0 0.0
    %v1127 = vand.u32 %v731, 4294901760
    %1128 = vmatpush1.msra.mxu0 %v1127
    %1129 = vmatprep.subr.mxu0 0.0
    %v1130 = vand.u32 %v730, 4294901760
    %1131 = vmatpush1.msra.mxu0 %v1130
    %1132 = vmatprep.subr.mxu0 0.0
    %v1133 = vand.u32 %v729, 4294901760
    %1134 = vmatpush1.msra.mxu0 %v1133
    %1135 = vmatprep.subr.mxu0 0.0
    %v1136 = vand.u32 %v728, 4294901760
    %1137 = vmatpush1.msra.mxu0 %v1136
    %1138 = vmatprep.subr.mxu0 0.0
    %1139 = vmatpush2.msra.mxu0 0.0
    %1140 = vmatprep.subr.mxu0 0.0
    %1141 = vmatpush2.msra.mxu0 0.0
    %1142 = vmatprep.subr.mxu0 0.0
    %1143 = vmatpush2.msra.mxu0 0.0
    %1144 = vmatprep.subr.mxu0 0.0
    %1145 = vmatpush2.msra.mxu0 0.0
    %1146 = vmatprep.subr.mxu0 0.0
    %1147 = vmatpush2.msra.mxu0 0.0
    %1148 = vmatprep.subr.mxu0 0.0
    %1149 = vmatpush2.msra.mxu0 0.0
    %1150 = vmatprep.subr.mxu0 0.0
    %1151 = vmatpush2.msra.mxu0 0.0
    %1152 = vmatprep.subr.mxu0 0.0
    %1153 = vmatpush2.msra.mxu0 0.0
    %1154 = vmatprep.subr.mxu0 0.0
    %1155 = vmatpush2.msra.mxu0 0.0
    %1156 = vmatprep.subr.mxu0 0.0
    %1157 = vmatpush2.msra.mxu0 0.0
    %1158 = vmatprep.subr.mxu0 0.0
    %1159 = vmatpush2.msra.mxu0 0.0
    %1160 = vmatprep.subr.mxu0 0.0
    %1161 = vmatpush2.msra.mxu0 0.0
    %1162 = vmatprep.subr.mxu0 0.0
    %1163 = vmatpush2.msra.mxu0 0.0
    %1164 = vmatprep.subr.mxu0 0.0
    %1165 = vmatpush2.msra.mxu0 0.0
    %1166 = vmatprep.subr.mxu0 0.0
    %1167 = vmatpush2.msra.mxu0 0.0
    %1168 = vmatprep.subr.mxu0 0.0
    %1169 = vmatpush2.msra.mxu0 0.0
    %1170 = vmatprep.mubr.f32.mxu0 0.0
    %v1171 = vand.u32 %v726, 4294901760
    %v1172 = vsub.f32 %v726, %v1171
    %v1173 = vand.u32 %v1172, 4294901760
    %1174 = vmatmul.mubr.f32.gmra.mxu0 %v1173
    %v1175 = vpop.f32.mrf.mxu0
    %v1176 = vadd.f32 %v1087, %v1175
    %v1177 = vpop.f32.mrf.mxu0
    %1178 = vdwg.mxu0
    %1179 = vmatprep.subr.mxu0 0.0
    %v1180 = vand.u32 %v743, 4294901760
    %v1181 = vsub.f32 %v743, %v1180
    %v1182 = vand.u32 %v1181, 4294901760
    %1183 = vmatpush1.msra.mxu0 %v1182
    %1184 = vmatprep.subr.mxu0 0.0
    %v1185 = vand.u32 %v742, 4294901760
    %v1186 = vsub.f32 %v742, %v1185
    %v1187 = vand.u32 %v1186, 4294901760
    %1188 = vmatpush1.msra.mxu0 %v1187
    %1189 = vmatprep.subr.mxu0 0.0
    %v1190 = vand.u32 %v741, 4294901760
    %v1191 = vsub.f32 %v741, %v1190
    %v1192 = vand.u32 %v1191, 4294901760
    %1193 = vmatpush1.msra.mxu0 %v1192
    %1194 = vmatprep.subr.mxu0 0.0
    %v1195 = vand.u32 %v740, 4294901760
    %v1196 = vsub.f32 %v740, %v1195
    %v1197 = vand.u32 %v1196, 4294901760
    %1198 = vmatpush1.msra.mxu0 %v1197
    %1199 = vmatprep.subr.mxu0 0.0
    %v1200 = vand.u32 %v739, 4294901760
    %v1201 = vsub.f32 %v739, %v1200
    %v1202 = vand.u32 %v1201, 4294901760
    %1203 = vmatpush1.msra.mxu0 %v1202
    %1204 = vmatprep.subr.mxu0 0.0
    %v1205 = vand.u32 %v738, 4294901760
    %v1206 = vsub.f32 %v738, %v1205
    %v1207 = vand.u32 %v1206, 4294901760
    %1208 = vmatpush1.msra.mxu0 %v1207
    %1209 = vmatprep.subr.mxu0 0.0
    %v1210 = vand.u32 %v737, 4294901760
    %v1211 = vsub.f32 %v737, %v1210
    %v1212 = vand.u32 %v1211, 4294901760
    %1213 = vmatpush1.msra.mxu0 %v1212
    %1214 = vmatprep.subr.mxu0 0.0
    %v1215 = vand.u32 %v736, 4294901760
    %v1216 = vsub.f32 %v736, %v1215
    %v1217 = vand.u32 %v1216, 4294901760
    %1218 = vmatpush1.msra.mxu0 %v1217
    %1219 = vmatprep.subr.mxu0 0.0
    %v1220 = vand.u32 %v735, 4294901760
    %v1221 = vsub.f32 %v735, %v1220
    %v1222 = vand.u32 %v1221, 4294901760
    %1223 = vmatpush1.msra.mxu0 %v1222
    %1224 = vmatprep.subr.mxu0 0.0
    %v1225 = vand.u32 %v734, 4294901760
    %v1226 = vsub.f32 %v734, %v1225
    %v1227 = vand.u32 %v1226, 4294901760
    %1228 = vmatpush1.msra.mxu0 %v1227
    %1229 = vmatprep.subr.mxu0 0.0
    %v1230 = vand.u32 %v733, 4294901760
    %v1231 = vsub.f32 %v733, %v1230
    %v1232 = vand.u32 %v1231, 4294901760
    %1233 = vmatpush1.msra.mxu0 %v1232
    %1234 = vmatprep.subr.mxu0 0.0
    %v1235 = vand.u32 %v732, 4294901760
    %v1236 = vsub.f32 %v732, %v1235
    %v1237 = vand.u32 %v1236, 4294901760
    %1238 = vmatpush1.msra.mxu0 %v1237
    %1239 = vmatprep.subr.mxu0 0.0
    %v1240 = vand.u32 %v731, 4294901760
    %v1241 = vsub.f32 %v731, %v1240
    %v1242 = vand.u32 %v1241, 4294901760
    %1243 = vmatpush1.msra.mxu0 %v1242
    %1244 = vmatprep.subr.mxu0 0.0
    %v1245 = vand.u32 %v730, 4294901760
    %v1246 = vsub.f32 %v730, %v1245
    %v1247 = vand.u32 %v1246, 4294901760
    %1248 = vmatpush1.msra.mxu0 %v1247
    %1249 = vmatprep.subr.mxu0 0.0
    %v1250 = vand.u32 %v729, 4294901760
    %v1251 = vsub.f32 %v729, %v1250
    %v1252 = vand.u32 %v1251, 4294901760
    %1253 = vmatpush1.msra.mxu0 %v1252
    %1254 = vmatprep.subr.mxu0 0.0
    %v1255 = vand.u32 %v728, 4294901760
    %v1256 = vsub.f32 %v728, %v1255
    %v1257 = vand.u32 %v1256, 4294901760
    %1258 = vmatpush1.msra.mxu0 %v1257
    %1259 = vmatprep.subr.mxu0 0.0
    %1260 = vmatpush2.msra.mxu0 0.0
    %1261 = vmatprep.subr.mxu0 0.0
    %1262 = vmatpush2.msra.mxu0 0.0
    %1263 = vmatprep.subr.mxu0 0.0
    %1264 = vmatpush2.msra.mxu0 0.0
    %1265 = vmatprep.subr.mxu0 0.0
    %1266 = vmatpush2.msra.mxu0 0.0
    %1267 = vmatprep.subr.mxu0 0.0
    %1268 = vmatpush2.msra.mxu0 0.0
    %1269 = vmatprep.subr.mxu0 0.0
    %1270 = vmatpush2.msra.mxu0 0.0
    %1271 = vmatprep.subr.mxu0 0.0
    %1272 = vmatpush2.msra.mxu0 0.0
    %1273 = vmatprep.subr.mxu0 0.0
    %1274 = vmatpush2.msra.mxu0 0.0
    %1275 = vmatprep.subr.mxu0 0.0
    %1276 = vmatpush2.msra.mxu0 0.0
    %1277 = vmatprep.subr.mxu0 0.0
    %1278 = vmatpush2.msra.mxu0 0.0
    %1279 = vmatprep.subr.mxu0 0.0
    %1280 = vmatpush2.msra.mxu0 0.0
    %1281 = vmatprep.subr.mxu0 0.0
    %1282 = vmatpush2.msra.mxu0 0.0
    %1283 = vmatprep.subr.mxu0 0.0
    %1284 = vmatpush2.msra.mxu0 0.0
    %1285 = vmatprep.subr.mxu0 0.0
    %1286 = vmatpush2.msra.mxu0 0.0
    %1287 = vmatprep.subr.mxu0 0.0
    %1288 = vmatpush2.msra.mxu0 0.0
    %1289 = vmatprep.subr.mxu0 0.0
    %1290 = vmatpush2.msra.mxu0 0.0
    %1291 = vmatprep.mubr.f32.mxu0 0.0
    %v1292 = vand.u32 %v726, 4294901760
    %1293 = vmatmul.mubr.f32.gmra.mxu0 %v1292
    %v1294 = vpop.f32.mrf.mxu0
    %v1295 = vadd.f32 %v1176, %v1294
    %v1296 = vpop.f32.mrf.mxu0
    %1297 = vdwg.mxu0
    %1298 = vmatprep.subr.mxu0 0.0
    %v1299 = vand.u32 %v743, 4294901760
    %1300 = vmatpush1.msra.mxu0 %v1299
    %1301 = vmatprep.subr.mxu0 0.0
    %v1302 = vand.u32 %v742, 4294901760
    %1303 = vmatpush1.msra.mxu0 %v1302
    %1304 = vmatprep.subr.mxu0 0.0
    %v1305 = vand.u32 %v741, 4294901760
    %1306 = vmatpush1.msra.mxu0 %v1305
    %1307 = vmatprep.subr.mxu0 0.0
    %v1308 = vand.u32 %v740, 4294901760
    %1309 = vmatpush1.msra.mxu0 %v1308
    %1310 = vmatprep.subr.mxu0 0.0
    %v1311 = vand.u32 %v739, 4294901760
    %1312 = vmatpush1.msra.mxu0 %v1311
    %1313 = vmatprep.subr.mxu0 0.0
    %v1314 = vand.u32 %v738, 4294901760
    %1315 = vmatpush1.msra.mxu0 %v1314
    %1316 = vmatprep.subr.mxu0 0.0
    %v1317 = vand.u32 %v737, 4294901760
    %1318 = vmatpush1.msra.mxu0 %v1317
    %1319 = vmatprep.subr.mxu0 0.0
    %v1320 = vand.u32 %v736, 4294901760
    %1321 = vmatpush1.msra.mxu0 %v1320
    %1322 = vmatprep.subr.mxu0 0.0
    %v1323 = vand.u32 %v735, 4294901760
    %1324 = vmatpush1.msra.mxu0 %v1323
    %1325 = vmatprep.subr.mxu0 0.0
    %v1326 = vand.u32 %v734, 4294901760
    %1327 = vmatpush1.msra.mxu0 %v1326
    %1328 = vmatprep.subr.mxu0 0.0
    %v1329 = vand.u32 %v733, 4294901760
    %1330 = vmatpush1.msra.mxu0 %v1329
    %1331 = vmatprep.subr.mxu0 0.0
    %v1332 = vand.u32 %v732, 4294901760
    %1333 = vmatpush1.msra.mxu0 %v1332
    %1334 = vmatprep.subr.mxu0 0.0
    %v1335 = vand.u32 %v731, 4294901760
    %1336 = vmatpush1.msra.mxu0 %v1335
    %1337 = vmatprep.subr.mxu0 0.0
    %v1338 = vand.u32 %v730, 4294901760
    %1339 = vmatpush1.msra.mxu0 %v1338
    %1340 = vmatprep.subr.mxu0 0.0
    %v1341 = vand.u32 %v729, 4294901760
    %1342 = vmatpush1.msra.mxu0 %v1341
    %1343 = vmatprep.subr.mxu0 0.0
    %v1344 = vand.u32 %v728, 4294901760
    %1345 = vmatpush1.msra.mxu0 %v1344
    %1346 = vmatprep.subr.mxu0 0.0
    %1347 = vmatpush2.msra.mxu0 0.0
    %1348 = vmatprep.subr.mxu0 0.0
    %1349 = vmatpush2.msra.mxu0 0.0
    %1350 = vmatprep.subr.mxu0 0.0
    %1351 = vmatpush2.msra.mxu0 0.0
    %1352 = vmatprep.subr.mxu0 0.0
    %1353 = vmatpush2.msra.mxu0 0.0
    %1354 = vmatprep.subr.mxu0 0.0
    %1355 = vmatpush2.msra.mxu0 0.0
    %1356 = vmatprep.subr.mxu0 0.0
    %1357 = vmatpush2.msra.mxu0 0.0
    %1358 = vmatprep.subr.mxu0 0.0
    %1359 = vmatpush2.msra.mxu0 0.0
    %1360 = vmatprep.subr.mxu0 0.0
    %1361 = vmatpush2.msra.mxu0 0.0
    %1362 = vmatprep.subr.mxu0 0.0
    %1363 = vmatpush2.msra.mxu0 0.0
    %1364 = vmatprep.subr.mxu0 0.0
    %1365 = vmatpush2.msra.mxu0 0.0
    %1366 = vmatprep.subr.mxu0 0.0
    %1367 = vmatpush2.msra.mxu0 0.0
    %1368 = vmatprep.subr.mxu0 0.0
    %1369 = vmatpush2.msra.mxu0 0.0
    %1370 = vmatprep.subr.mxu0 0.0
    %1371 = vmatpush2.msra.mxu0 0.0
    %1372 = vmatprep.subr.mxu0 0.0
    %1373 = vmatpush2.msra.mxu0 0.0
    %1374 = vmatprep.subr.mxu0 0.0
    %1375 = vmatpush2.msra.mxu0 0.0
    %1376 = vmatprep.subr.mxu0 0.0
    %1377 = vmatpush2.msra.mxu0 0.0
    %1378 = vmatprep.mubr.f32.mxu0 0.0
    %v1379 = vand.u32 %v726, 4294901760
    %1380 = vmatmul.mubr.f32.gmra.mxu0 %v1379
    %v1381 = vpop.f32.mrf.mxu0
    %v1382 = vadd.f32 %v1295, %v1381
    %v1383 = vpop.f32.mrf.mxu0
    %1384 = vdwg.mxu0
    %v1385 = vmul.f32 %v67, %v1382
    %v1386 = vadd.f32 %v1385, %v726
    %s1387 = scalar_lea.vmem [#allocation5], 256
    %v1388 = vld [vmem:[%s1387] sm:$0xff]
    %v1389 = vld [vmem:[%s1387 + $0x8] sm:$0xff]
    %v1390 = vld [vmem:[%s1387 + $0x10] sm:$0xff]
    %v1391 = vld [vmem:[%s1387 + $0x18] sm:$0xff]
    %v1392 = vld [vmem:[%s1387 + $0x20] sm:$0xff]
    %v1393 = vld [vmem:[%s1387 + $0x28] sm:$0xff]
    %v1394 = vld [vmem:[%s1387 + $0x30] sm:$0xff]
    %v1395 = vld [vmem:[%s1387 + $0x38] sm:$0xff]
    %v1396 = vld [vmem:[%s1387 + $0x40] sm:$0xff]
    %v1397 = vld [vmem:[%s1387 + $0x48] sm:$0xff]
    %v1398 = vld [vmem:[%s1387 + $0x50] sm:$0xff]
    %v1399 = vld [vmem:[%s1387 + $0x58] sm:$0xff]
    %v1400 = vld [vmem:[%s1387 + $0x60] sm:$0xff]
    %v1401 = vld [vmem:[%s1387 + $0x68] sm:$0xff]
    %v1402 = vld [vmem:[%s1387 + $0x70] sm:$0xff]
    %v1403 = vld [vmem:[%s1387 + $0x78] sm:$0xff]
    %1404 = vmatprep.subr.mxu0 0.0
    %v1405 = vand.u32 %v1403, 4294901760
    %1406 = vmatpush1.msra.mxu0 %v1405
    %1407 = vmatprep.subr.mxu0 0.0
    %v1408 = vand.u32 %v1402, 4294901760
    %1409 = vmatpush1.msra.mxu0 %v1408
    %1410 = vmatprep.subr.mxu0 0.0
    %v1411 = vand.u32 %v1401, 4294901760
    %1412 = vmatpush1.msra.mxu0 %v1411
    %1413 = vmatprep.subr.mxu0 0.0
    %v1414 = vand.u32 %v1400, 4294901760
    %1415 = vmatpush1.msra.mxu0 %v1414
    %1416 = vmatprep.subr.mxu0 0.0
    %v1417 = vand.u32 %v1399, 4294901760
    %1418 = vmatpush1.msra.mxu0 %v1417
    %1419 = vmatprep.subr.mxu0 0.0
    %v1420 = vand.u32 %v1398, 4294901760
    %1421 = vmatpush1.msra.mxu0 %v1420
    %1422 = vmatprep.subr.mxu0 0.0
    %v1423 = vand.u32 %v1397, 4294901760
    %1424 = vmatpush1.msra.mxu0 %v1423
    %1425 = vmatprep.subr.mxu0 0.0
    %v1426 = vand.u32 %v1396, 4294901760
    %1427 = vmatpush1.msra.mxu0 %v1426
    %1428 = vmatprep.subr.mxu0 0.0
    %v1429 = vand.u32 %v1395, 4294901760
    %1430 = vmatpush1.msra.mxu0 %v1429
    %1431 = vmatprep.subr.mxu0 0.0
    %v1432 = vand.u32 %v1394, 4294901760
    %1433 = vmatpush1.msra.mxu0 %v1432
    %1434 = vmatprep.subr.mxu0 0.0
    %v1435 = vand.u32 %v1393, 4294901760
    %1436 = vmatpush1.msra.mxu0 %v1435
    %1437 = vmatprep.subr.mxu0 0.0
    %v1438 = vand.u32 %v1392, 4294901760
    %1439 = vmatpush1.msra.mxu0 %v1438
    %1440 = vmatprep.subr.mxu0 0.0
    %v1441 = vand.u32 %v1391, 4294901760
    %1442 = vmatpush1.msra.mxu0 %v1441
    %1443 = vmatprep.subr.mxu0 0.0
    %v1444 = vand.u32 %v1390, 4294901760
    %1445 = vmatpush1.msra.mxu0 %v1444
    %1446 = vmatprep.subr.mxu0 0.0
    %v1447 = vand.u32 %v1389, 4294901760
    %1448 = vmatpush1.msra.mxu0 %v1447
    %1449 = vmatprep.subr.mxu0 0.0
    %v1450 = vand.u32 %v1388, 4294901760
    %1451 = vmatpush1.msra.mxu0 %v1450
    %1452 = vmatprep.subr.mxu0 0.0
    %1453 = vmatpush2.msra.mxu0 0.0
    %1454 = vmatprep.subr.mxu0 0.0
    %1455 = vmatpush2.msra.mxu0 0.0
    %1456 = vmatprep.subr.mxu0 0.0
    %1457 = vmatpush2.msra.mxu0 0.0
    %1458 = vmatprep.subr.mxu0 0.0
    %1459 = vmatpush2.msra.mxu0 0.0
    %1460 = vmatprep.subr.mxu0 0.0
    %1461 = vmatpush2.msra.mxu0 0.0
    %1462 = vmatprep.subr.mxu0 0.0
    %1463 = vmatpush2.msra.mxu0 0.0
    %1464 = vmatprep.subr.mxu0 0.0
    %1465 = vmatpush2.msra.mxu0 0.0
    %1466 = vmatprep.subr.mxu0 0.0
    %1467 = vmatpush2.msra.mxu0 0.0
    %1468 = vmatprep.subr.mxu0 0.0
    %1469 = vmatpush2.msra.mxu0 0.0
    %1470 = vmatprep.subr.mxu0 0.0
    %1471 = vmatpush2.msra.mxu0 0.0
    %1472 = vmatprep.subr.mxu0 0.0
    %1473 = vmatpush2.msra.mxu0 0.0
    %1474 = vmatprep.subr.mxu0 0.0
    %1475 = vmatpush2.msra.mxu0 0.0
    %1476 = vmatprep.subr.mxu0 0.0
    %1477 = vmatpush2.msra.mxu0 0.0
    %1478 = vmatprep.subr.mxu0 0.0
    %1479 = vmatpush2.msra.mxu0 0.0
    %1480 = vmatprep.subr.mxu0 0.0
    %1481 = vmatpush2.msra.mxu0 0.0
    %1482 = vmatprep.subr.mxu0 0.0
    %1483 = vmatpush2.msra.mxu0 0.0
    %1484 = vmatprep.mubr.f32.mxu0 0.0
    %v1485 = vand.u32 %v1386, 4294901760
    %v1486 = vsub.f32 %v1386, %v1485
    %v1487 = vand.u32 %v1486, 4294901760
    %v1488 = vsub.f32 %v1486, %v1487
    %v1489 = vand.u32 %v1488, 4294901760
    %1490 = vmatmul.mubr.f32.gmra.mxu0 %v1489
    %v1491 = vpop.f32.mrf.mxu0
    %v1492 = vadd.f32 %v66, %v1491
    %v1493 = vpop.f32.mrf.mxu0
    %1494 = vdwg.mxu0
    %1495 = vmatprep.subr.mxu0 0.0
    %v1496 = vand.u32 %v1403, 4294901760
    %v1497 = vsub.f32 %v1403, %v1496
    %v1498 = vand.u32 %v1497, 4294901760
    %v1499 = vsub.f32 %v1497, %v1498
    %v1500 = vand.u32 %v1499, 4294901760
    %1501 = vmatpush1.msra.mxu0 %v1500
    %1502 = vmatprep.subr.mxu0 0.0
    %v1503 = vand.u32 %v1402, 4294901760
    %v1504 = vsub.f32 %v1402, %v1503
    %v1505 = vand.u32 %v1504, 4294901760
    %v1506 = vsub.f32 %v1504, %v1505
    %v1507 = vand.u32 %v1506, 4294901760
    %1508 = vmatpush1.msra.mxu0 %v1507
    %1509 = vmatprep.subr.mxu0 0.0
    %v1510 = vand.u32 %v1401, 4294901760
    %v1511 = vsub.f32 %v1401, %v1510
    %v1512 = vand.u32 %v1511, 4294901760
    %v1513 = vsub.f32 %v1511, %v1512
    %v1514 = vand.u32 %v1513, 4294901760
    %1515 = vmatpush1.msra.mxu0 %v1514
    %1516 = vmatprep.subr.mxu0 0.0
    %v1517 = vand.u32 %v1400, 4294901760
    %v1518 = vsub.f32 %v1400, %v1517
    %v1519 = vand.u32 %v1518, 4294901760
    %v1520 = vsub.f32 %v1518, %v1519
    %v1521 = vand.u32 %v1520, 4294901760
    %1522 = vmatpush1.msra.mxu0 %v1521
    %1523 = vmatprep.subr.mxu0 0.0
    %v1524 = vand.u32 %v1399, 4294901760
    %v1525 = vsub.f32 %v1399, %v1524
    %v1526 = vand.u32 %v1525, 4294901760
    %v1527 = vsub.f32 %v1525, %v1526
    %v1528 = vand.u32 %v1527, 4294901760
    %1529 = vmatpush1.msra.mxu0 %v1528
    %1530 = vmatprep.subr.mxu0 0.0
    %v1531 = vand.u32 %v1398, 4294901760
    %v1532 = vsub.f32 %v1398, %v1531
    %v1533 = vand.u32 %v1532, 4294901760
    %v1534 = vsub.f32 %v1532, %v1533
    %v1535 = vand.u32 %v1534, 4294901760
    %1536 = vmatpush1.msra.mxu0 %v1535
    %1537 = vmatprep.subr.mxu0 0.0
    %v1538 = vand.u32 %v1397, 4294901760
    %v1539 = vsub.f32 %v1397, %v1538
    %v1540 = vand.u32 %v1539, 4294901760
    %v1541 = vsub.f32 %v1539, %v1540
    %v1542 = vand.u32 %v1541, 4294901760
    %1543 = vmatpush1.msra.mxu0 %v1542
    %1544 = vmatprep.subr.mxu0 0.0
    %v1545 = vand.u32 %v1396, 4294901760
    %v1546 = vsub.f32 %v1396, %v1545
    %v1547 = vand.u32 %v1546, 4294901760
    %v1548 = vsub.f32 %v1546, %v1547
    %v1549 = vand.u32 %v1548, 4294901760
    %1550 = vmatpush1.msra.mxu0 %v1549
    %1551 = vmatprep.subr.mxu0 0.0
    %v1552 = vand.u32 %v1395, 4294901760
    %v1553 = vsub.f32 %v1395, %v1552
    %v1554 = vand.u32 %v1553, 4294901760
    %v1555 = vsub.f32 %v1553, %v1554
    %v1556 = vand.u32 %v1555, 4294901760
    %1557 = vmatpush1.msra.mxu0 %v1556
    %1558 = vmatprep.subr.mxu0 0.0
    %v1559 = vand.u32 %v1394, 4294901760
    %v1560 = vsub.f32 %v1394, %v1559
    %v1561 = vand.u32 %v1560, 4294901760
    %v1562 = vsub.f32 %v1560, %v1561
    %v1563 = vand.u32 %v1562, 4294901760
    %1564 = vmatpush1.msra.mxu0 %v1563
    %1565 = vmatprep.subr.mxu0 0.0
    %v1566 = vand.u32 %v1393, 4294901760
    %v1567 = vsub.f32 %v1393, %v1566
    %v1568 = vand.u32 %v1567, 4294901760
    %v1569 = vsub.f32 %v1567, %v1568
    %v1570 = vand.u32 %v1569, 4294901760
    %1571 = vmatpush1.msra.mxu0 %v1570
    %1572 = vmatprep.subr.mxu0 0.0
    %v1573 = vand.u32 %v1392, 4294901760
    %v1574 = vsub.f32 %v1392, %v1573
    %v1575 = vand.u32 %v1574, 4294901760
    %v1576 = vsub.f32 %v1574, %v1575
    %v1577 = vand.u32 %v1576, 4294901760
    %1578 = vmatpush1.msra.mxu0 %v1577
    %1579 = vmatprep.subr.mxu0 0.0
    %v1580 = vand.u32 %v1391, 4294901760
    %v1581 = vsub.f32 %v1391, %v1580
    %v1582 = vand.u32 %v1581, 4294901760
    %v1583 = vsub.f32 %v1581, %v1582
    %v1584 = vand.u32 %v1583, 4294901760
    %1585 = vmatpush1.msra.mxu0 %v1584
    %1586 = vmatprep.subr.mxu0 0.0
    %v1587 = vand.u32 %v1390, 4294901760
    %v1588 = vsub.f32 %v1390, %v1587
    %v1589 = vand.u32 %v1588, 4294901760
    %v1590 = vsub.f32 %v1588, %v1589
    %v1591 = vand.u32 %v1590, 4294901760
    %1592 = vmatpush1.msra.mxu0 %v1591
    %1593 = vmatprep.subr.mxu0 0.0
    %v1594 = vand.u32 %v1389, 4294901760
    %v1595 = vsub.f32 %v1389, %v1594
    %v1596 = vand.u32 %v1595, 4294901760
    %v1597 = vsub.f32 %v1595, %v1596
    %v1598 = vand.u32 %v1597, 4294901760
    %1599 = vmatpush1.msra.mxu0 %v1598
    %1600 = vmatprep.subr.mxu0 0.0
    %v1601 = vand.u32 %v1388, 4294901760
    %v1602 = vsub.f32 %v1388, %v1601
    %v1603 = vand.u32 %v1602, 4294901760
    %v1604 = vsub.f32 %v1602, %v1603
    %v1605 = vand.u32 %v1604, 4294901760
    %1606 = vmatpush1.msra.mxu0 %v1605
    %1607 = vmatprep.subr.mxu0 0.0
    %1608 = vmatpush2.msra.mxu0 0.0
    %1609 = vmatprep.subr.mxu0 0.0
    %1610 = vmatpush2.msra.mxu0 0.0
    %1611 = vmatprep.subr.mxu0 0.0
    %1612 = vmatpush2.msra.mxu0 0.0
    %1613 = vmatprep.subr.mxu0 0.0
    %1614 = vmatpush2.msra.mxu0 0.0
    %1615 = vmatprep.subr.mxu0 0.0
    %1616 = vmatpush2.msra.mxu0 0.0
    %1617 = vmatprep.subr.mxu0 0.0
    %1618 = vmatpush2.msra.mxu0 0.0
    %1619 = vmatprep.subr.mxu0 0.0
    %1620 = vmatpush2.msra.mxu0 0.0
    %1621 = vmatprep.subr.mxu0 0.0
    %1622 = vmatpush2.msra.mxu0 0.0
    %1623 = vmatprep.subr.mxu0 0.0
    %1624 = vmatpush2.msra.mxu0 0.0
    %1625 = vmatprep.subr.mxu0 0.0
    %1626 = vmatpush2.msra.mxu0 0.0
    %1627 = vmatprep.subr.mxu0 0.0
    %1628 = vmatpush2.msra.mxu0 0.0
    %1629 = vmatprep.subr.mxu0 0.0
    %1630 = vmatpush2.msra.mxu0 0.0
    %1631 = vmatprep.subr.mxu0 0.0
    %1632 = vmatpush2.msra.mxu0 0.0
    %1633 = vmatprep.subr.mxu0 0.0
    %1634 = vmatpush2.msra.mxu0 0.0
    %1635 = vmatprep.subr.mxu0 0.0
    %1636 = vmatpush2.msra.mxu0 0.0
    %1637 = vmatprep.subr.mxu0 0.0
    %1638 = vmatpush2.msra.mxu0 0.0
    %1639 = vmatprep.mubr.f32.mxu0 0.0
    %v1640 = vand.u32 %v1386, 4294901760
    %1641 = vmatmul.mubr.f32.gmra.mxu0 %v1640
    %v1642 = vpop.f32.mrf.mxu0
    %v1643 = vadd.f32 %v1492, %v1642
    %v1644 = vpop.f32.mrf.mxu0
    %1645 = vdwg.mxu0
    %1646 = vmatprep.subr.mxu0 0.0
    %v1647 = vand.u32 %v1403, 4294901760
    %v1648 = vsub.f32 %v1403, %v1647
    %1649 = vmatpush1.msra.mxu0 %v1648
    %1650 = vmatprep.subr.mxu0 0.0
    %v1651 = vand.u32 %v1402, 4294901760
    %v1652 = vsub.f32 %v1402, %v1651
    %1653 = vmatpush1.msra.mxu0 %v1652
    %1654 = vmatprep.subr.mxu0 0.0
    %v1655 = vand.u32 %v1401, 4294901760
    %v1656 = vsub.f32 %v1401, %v1655
    %1657 = vmatpush1.msra.mxu0 %v1656
    %1658 = vmatprep.subr.mxu0 0.0
    %v1659 = vand.u32 %v1400, 4294901760
    %v1660 = vsub.f32 %v1400, %v1659
    %1661 = vmatpush1.msra.mxu0 %v1660
    %1662 = vmatprep.subr.mxu0 0.0
    %v1663 = vand.u32 %v1399, 4294901760
    %v1664 = vsub.f32 %v1399, %v1663
    %1665 = vmatpush1.msra.mxu0 %v1664
    %1666 = vmatprep.subr.mxu0 0.0
    %v1667 = vand.u32 %v1398, 4294901760
    %v1668 = vsub.f32 %v1398, %v1667
    %1669 = vmatpush1.msra.mxu0 %v1668
    %1670 = vmatprep.subr.mxu0 0.0
    %v1671 = vand.u32 %v1397, 4294901760
    %v1672 = vsub.f32 %v1397, %v1671
    %1673 = vmatpush1.msra.mxu0 %v1672
    %1674 = vmatprep.subr.mxu0 0.0
    %v1675 = vand.u32 %v1396, 4294901760
    %v1676 = vsub.f32 %v1396, %v1675
    %1677 = vmatpush1.msra.mxu0 %v1676
    %1678 = vmatprep.subr.mxu0 0.0
    %v1679 = vand.u32 %v1395, 4294901760
    %v1680 = vsub.f32 %v1395, %v1679
    %1681 = vmatpush1.msra.mxu0 %v1680
    %1682 = vmatprep.subr.mxu0 0.0
    %v1683 = vand.u32 %v1394, 4294901760
    %v1684 = vsub.f32 %v1394, %v1683
    %1685 = vmatpush1.msra.mxu0 %v1684
    %1686 = vmatprep.subr.mxu0 0.0
    %v1687 = vand.u32 %v1393, 4294901760
    %v1688 = vsub.f32 %v1393, %v1687
    %1689 = vmatpush1.msra.mxu0 %v1688
    %1690 = vmatprep.subr.mxu0 0.0
    %v1691 = vand.u32 %v1392, 4294901760
    %v1692 = vsub.f32 %v1392, %v1691
    %1693 = vmatpush1.msra.mxu0 %v1692
    %1694 = vmatprep.subr.mxu0 0.0
    %v1695 = vand.u32 %v1391, 4294901760
    %v1696 = vsub.f32 %v1391, %v1695
    %1697 = vmatpush1.msra.mxu0 %v1696
    %1698 = vmatprep.subr.mxu0 0.0
    %v1699 = vand.u32 %v1390, 4294901760
    %v1700 = vsub.f32 %v1390, %v1699
    %1701 = vmatpush1.msra.mxu0 %v1700
    %1702 = vmatprep.subr.mxu0 0.0
    %v1703 = vand.u32 %v1389, 4294901760
    %v1704 = vsub.f32 %v1389, %v1703
    %1705 = vmatpush1.msra.mxu0 %v1704
    %1706 = vmatprep.subr.mxu0 0.0
    %v1707 = vand.u32 %v1388, 4294901760
    %v1708 = vsub.f32 %v1388, %v1707
    %1709 = vmatpush1.msra.mxu0 %v1708
    %1710 = vmatprep.subr.mxu0 0.0
    %1711 = vmatpush2.msra.mxu0 0.0
    %1712 = vmatprep.subr.mxu0 0.0
    %1713 = vmatpush2.msra.mxu0 0.0
    %1714 = vmatprep.subr.mxu0 0.0
    %1715 = vmatpush2.msra.mxu0 0.0
    %1716 = vmatprep.subr.mxu0 0.0
    %1717 = vmatpush2.msra.mxu0 0.0
    %1718 = vmatprep.subr.mxu0 0.0
    %1719 = vmatpush2.msra.mxu0 0.0
    %1720 = vmatprep.subr.mxu0 0.0
    %1721 = vmatpush2.msra.mxu0 0.0
    %1722 = vmatprep.subr.mxu0 0.0
    %1723 = vmatpush2.msra.mxu0 0.0
    %1724 = vmatprep.subr.mxu0 0.0
    %1725 = vmatpush2.msra.mxu0 0.0
    %1726 = vmatprep.subr.mxu0 0.0
    %1727 = vmatpush2.msra.mxu0 0.0
    %1728 = vmatprep.subr.mxu0 0.0
    %1729 = vmatpush2.msra.mxu0 0.0
    %1730 = vmatprep.subr.mxu0 0.0
    %1731 = vmatpush2.msra.mxu0 0.0
    %1732 = vmatprep.subr.mxu0 0.0
    %1733 = vmatpush2.msra.mxu0 0.0
    %1734 = vmatprep.subr.mxu0 0.0
    %1735 = vmatpush2.msra.mxu0 0.0
    %1736 = vmatprep.subr.mxu0 0.0
    %1737 = vmatpush2.msra.mxu0 0.0
    %1738 = vmatprep.subr.mxu0 0.0
    %1739 = vmatpush2.msra.mxu0 0.0
    %1740 = vmatprep.subr.mxu0 0.0
    %1741 = vmatpush2.msra.mxu0 0.0
    %1742 = vmatprep.mubr.f32.mxu0 0.0
    %v1743 = vand.u32 %v1386, 4294901760
    %v1744 = vsub.f32 %v1386, %v1743
    %1745 = vmatmul.mubr.f32.gmra.mxu0 %v1744
    %v1746 = vpop.f32.mrf.mxu0
    %v1747 = vadd.f32 %v1643, %v1746
    %v1748 = vpop.f32.mrf.mxu0
    %1749 = vdwg.mxu0
    %1750 = vmatprep.subr.mxu0 0.0
    %v1751 = vand.u32 %v1403, 4294901760
    %1752 = vmatpush1.msra.mxu0 %v1751
    %1753 = vmatprep.subr.mxu0 0.0
    %v1754 = vand.u32 %v1402, 4294901760
    %1755 = vmatpush1.msra.mxu0 %v1754
    %1756 = vmatprep.subr.mxu0 0.0
    %v1757 = vand.u32 %v1401, 4294901760
    %1758 = vmatpush1.msra.mxu0 %v1757
    %1759 = vmatprep.subr.mxu0 0.0
    %v1760 = vand.u32 %v1400, 4294901760
    %1761 = vmatpush1.msra.mxu0 %v1760
    %1762 = vmatprep.subr.mxu0 0.0
    %v1763 = vand.u32 %v1399, 4294901760
    %1764 = vmatpush1.msra.mxu0 %v1763
    %1765 = vmatprep.subr.mxu0 0.0
    %v1766 = vand.u32 %v1398, 4294901760
    %1767 = vmatpush1.msra.mxu0 %v1766
    %1768 = vmatprep.subr.mxu0 0.0
    %v1769 = vand.u32 %v1397, 4294901760
    %1770 = vmatpush1.msra.mxu0 %v1769
    %1771 = vmatprep.subr.mxu0 0.0
    %v1772 = vand.u32 %v1396, 4294901760
    %1773 = vmatpush1.msra.mxu0 %v1772
    %1774 = vmatprep.subr.mxu0 0.0
    %v1775 = vand.u32 %v1395, 4294901760
    %1776 = vmatpush1.msra.mxu0 %v1775
    %1777 = vmatprep.subr.mxu0 0.0
    %v1778 = vand.u32 %v1394, 4294901760
    %1779 = vmatpush1.msra.mxu0 %v1778
    %1780 = vmatprep.subr.mxu0 0.0
    %v1781 = vand.u32 %v1393, 4294901760
    %1782 = vmatpush1.msra.mxu0 %v1781
    %1783 = vmatprep.subr.mxu0 0.0
    %v1784 = vand.u32 %v1392, 4294901760
    %1785 = vmatpush1.msra.mxu0 %v1784
    %1786 = vmatprep.subr.mxu0 0.0
    %v1787 = vand.u32 %v1391, 4294901760
    %1788 = vmatpush1.msra.mxu0 %v1787
    %1789 = vmatprep.subr.mxu0 0.0
    %v1790 = vand.u32 %v1390, 4294901760
    %1791 = vmatpush1.msra.mxu0 %v1790
    %1792 = vmatprep.subr.mxu0 0.0
    %v1793 = vand.u32 %v1389, 4294901760
    %1794 = vmatpush1.msra.mxu0 %v1793
    %1795 = vmatprep.subr.mxu0 0.0
    %v1796 = vand.u32 %v1388, 4294901760
    %1797 = vmatpush1.msra.mxu0 %v1796
    %1798 = vmatprep.subr.mxu0 0.0
    %1799 = vmatpush2.msra.mxu0 0.0
    %1800 = vmatprep.subr.mxu0 0.0
    %1801 = vmatpush2.msra.mxu0 0.0
    %1802 = vmatprep.subr.mxu0 0.0
    %1803 = vmatpush2.msra.mxu0 0.0
    %1804 = vmatprep.subr.mxu0 0.0
    %1805 = vmatpush2.msra.mxu0 0.0
    %1806 = vmatprep.subr.mxu0 0.0
    %1807 = vmatpush2.msra.mxu0 0.0
    %1808 = vmatprep.subr.mxu0 0.0
    %1809 = vmatpush2.msra.mxu0 0.0
    %1810 = vmatprep.subr.mxu0 0.0
    %1811 = vmatpush2.msra.mxu0 0.0
    %1812 = vmatprep.subr.mxu0 0.0
    %1813 = vmatpush2.msra.mxu0 0.0
    %1814 = vmatprep.subr.mxu0 0.0
    %1815 = vmatpush2.msra.mxu0 0.0
    %1816 = vmatprep.subr.mxu0 0.0
    %1817 = vmatpush2.msra.mxu0 0.0
    %1818 = vmatprep.subr.mxu0 0.0
    %1819 = vmatpush2.msra.mxu0 0.0
    %1820 = vmatprep.subr.mxu0 0.0
    %1821 = vmatpush2.msra.mxu0 0.0
    %1822 = vmatprep.subr.mxu0 0.0
    %1823 = vmatpush2.msra.mxu0 0.0
    %1824 = vmatprep.subr.mxu0 0.0
    %1825 = vmatpush2.msra.mxu0 0.0
    %1826 = vmatprep.subr.mxu0 0.0
    %1827 = vmatpush2.msra.mxu0 0.0
    %1828 = vmatprep.subr.mxu0 0.0
    %1829 = vmatpush2.msra.mxu0 0.0
    %1830 = vmatprep.mubr.f32.mxu0 0.0
    %v1831 = vand.u32 %v1386, 4294901760
    %v1832 = vsub.f32 %v1386, %v1831
    %v1833 = vand.u32 %v1832, 4294901760
    %1834 = vmatmul.mubr.f32.gmra.mxu0 %v1833
    %v1835 = vpop.f32.mrf.mxu0
    %v1836 = vadd.f32 %v1747, %v1835
    %v1837 = vpop.f32.mrf.mxu0
    %1838 = vdwg.mxu0
    %1839 = vmatprep.subr.mxu0 0.0
    %v1840 = vand.u32 %v1403, 4294901760
    %v1841 = vsub.f32 %v1403, %v1840
    %v1842 = vand.u32 %v1841, 4294901760
    %1843 = vmatpush1.msra.mxu0 %v1842
    %1844 = vmatprep.subr.mxu0 0.0
    %v1845 = vand.u32 %v1402, 4294901760
    %v1846 = vsub.f32 %v1402, %v1845
    %v1847 = vand.u32 %v1846, 4294901760
    %1848 = vmatpush1.msra.mxu0 %v1847
    %1849 = vmatprep.subr.mxu0 0.0
    %v1850 = vand.u32 %v1401, 4294901760
    %v1851 = vsub.f32 %v1401, %v1850
    %v1852 = vand.u32 %v1851, 4294901760
    %1853 = vmatpush1.msra.mxu0 %v1852
    %1854 = vmatprep.subr.mxu0 0.0
    %v1855 = vand.u32 %v1400, 4294901760
    %v1856 = vsub.f32 %v1400, %v1855
    %v1857 = vand.u32 %v1856, 4294901760
    %1858 = vmatpush1.msra.mxu0 %v1857
    %1859 = vmatprep.subr.mxu0 0.0
    %v1860 = vand.u32 %v1399, 4294901760
    %v1861 = vsub.f32 %v1399, %v1860
    %v1862 = vand.u32 %v1861, 4294901760
    %1863 = vmatpush1.msra.mxu0 %v1862
    %1864 = vmatprep.subr.mxu0 0.0
    %v1865 = vand.u32 %v1398, 4294901760
    %v1866 = vsub.f32 %v1398, %v1865
    %v1867 = vand.u32 %v1866, 4294901760
    %1868 = vmatpush1.msra.mxu0 %v1867
    %1869 = vmatprep.subr.mxu0 0.0
    %v1870 = vand.u32 %v1397, 4294901760
    %v1871 = vsub.f32 %v1397, %v1870
    %v1872 = vand.u32 %v1871, 4294901760
    %1873 = vmatpush1.msra.mxu0 %v1872
    %1874 = vmatprep.subr.mxu0 0.0
    %v1875 = vand.u32 %v1396, 4294901760
    %v1876 = vsub.f32 %v1396, %v1875
    %v1877 = vand.u32 %v1876, 4294901760
    %1878 = vmatpush1.msra.mxu0 %v1877
    %1879 = vmatprep.subr.mxu0 0.0
    %v1880 = vand.u32 %v1395, 4294901760
    %v1881 = vsub.f32 %v1395, %v1880
    %v1882 = vand.u32 %v1881, 4294901760
    %1883 = vmatpush1.msra.mxu0 %v1882
    %1884 = vmatprep.subr.mxu0 0.0
    %v1885 = vand.u32 %v1394, 4294901760
    %v1886 = vsub.f32 %v1394, %v1885
    %v1887 = vand.u32 %v1886, 4294901760
    %1888 = vmatpush1.msra.mxu0 %v1887
    %1889 = vmatprep.subr.mxu0 0.0
    %v1890 = vand.u32 %v1393, 4294901760
    %v1891 = vsub.f32 %v1393, %v1890
    %v1892 = vand.u32 %v1891, 4294901760
    %1893 = vmatpush1.msra.mxu0 %v1892
    %1894 = vmatprep.subr.mxu0 0.0
    %v1895 = vand.u32 %v1392, 4294901760
    %v1896 = vsub.f32 %v1392, %v1895
    %v1897 = vand.u32 %v1896, 4294901760
    %1898 = vmatpush1.msra.mxu0 %v1897
    %1899 = vmatprep.subr.mxu0 0.0
    %v1900 = vand.u32 %v1391, 4294901760
    %v1901 = vsub.f32 %v1391, %v1900
    %v1902 = vand.u32 %v1901, 4294901760
    %1903 = vmatpush1.msra.mxu0 %v1902
    %1904 = vmatprep.subr.mxu0 0.0
    %v1905 = vand.u32 %v1390, 4294901760
    %v1906 = vsub.f32 %v1390, %v1905
    %v1907 = vand.u32 %v1906, 4294901760
    %1908 = vmatpush1.msra.mxu0 %v1907
    %1909 = vmatprep.subr.mxu0 0.0
    %v1910 = vand.u32 %v1389, 4294901760
    %v1911 = vsub.f32 %v1389, %v1910
    %v1912 = vand.u32 %v1911, 4294901760
    %1913 = vmatpush1.msra.mxu0 %v1912
    %1914 = vmatprep.subr.mxu0 0.0
    %v1915 = vand.u32 %v1388, 4294901760
    %v1916 = vsub.f32 %v1388, %v1915
    %v1917 = vand.u32 %v1916, 4294901760
    %1918 = vmatpush1.msra.mxu0 %v1917
    %1919 = vmatprep.subr.mxu0 0.0
    %1920 = vmatpush2.msra.mxu0 0.0
    %1921 = vmatprep.subr.mxu0 0.0
    %1922 = vmatpush2.msra.mxu0 0.0
    %1923 = vmatprep.subr.mxu0 0.0
    %1924 = vmatpush2.msra.mxu0 0.0
    %1925 = vmatprep.subr.mxu0 0.0
    %1926 = vmatpush2.msra.mxu0 0.0
    %1927 = vmatprep.subr.mxu0 0.0
    %1928 = vmatpush2.msra.mxu0 0.0
    %1929 = vmatprep.subr.mxu0 0.0
    %1930 = vmatpush2.msra.mxu0 0.0
    %1931 = vmatprep.subr.mxu0 0.0
    %1932 = vmatpush2.msra.mxu0 0.0
    %1933 = vmatprep.subr.mxu0 0.0
    %1934 = vmatpush2.msra.mxu0 0.0
    %1935 = vmatprep.subr.mxu0 0.0
    %1936 = vmatpush2.msra.mxu0 0.0
    %1937 = vmatprep.subr.mxu0 0.0
    %1938 = vmatpush2.msra.mxu0 0.0
    %1939 = vmatprep.subr.mxu0 0.0
    %1940 = vmatpush2.msra.mxu0 0.0
    %1941 = vmatprep.subr.mxu0 0.0
    %1942 = vmatpush2.msra.mxu0 0.0
    %1943 = vmatprep.subr.mxu0 0.0
    %1944 = vmatpush2.msra.mxu0 0.0
    %1945 = vmatprep.subr.mxu0 0.0
    %1946 = vmatpush2.msra.mxu0 0.0
    %1947 = vmatprep.subr.mxu0 0.0
    %1948 = vmatpush2.msra.mxu0 0.0
    %1949 = vmatprep.subr.mxu0 0.0
    %1950 = vmatpush2.msra.mxu0 0.0
    %1951 = vmatprep.mubr.f32.mxu0 0.0
    %v1952 = vand.u32 %v1386, 4294901760
    %1953 = vmatmul.mubr.f32.gmra.mxu0 %v1952
    %v1954 = vpop.f32.mrf.mxu0
    %v1955 = vadd.f32 %v1836, %v1954
    %v1956 = vpop.f32.mrf.mxu0
    %1957 = vdwg.mxu0
    %1958 = vmatprep.subr.mxu0 0.0
    %v1959 = vand.u32 %v1403, 4294901760
    %1960 = vmatpush1.msra.mxu0 %v1959
    %1961 = vmatprep.subr.mxu0 0.0
    %v1962 = vand.u32 %v1402, 4294901760
    %1963 = vmatpush1.msra.mxu0 %v1962
    %1964 = vmatprep.subr.mxu0 0.0
    %v1965 = vand.u32 %v1401, 4294901760
    %1966 = vmatpush1.msra.mxu0 %v1965
    %1967 = vmatprep.subr.mxu0 0.0
    %v1968 = vand.u32 %v1400, 4294901760
    %1969 = vmatpush1.msra.mxu0 %v1968
    %1970 = vmatprep.subr.mxu0 0.0
    %v1971 = vand.u32 %v1399, 4294901760
    %1972 = vmatpush1.msra.mxu0 %v1971
    %1973 = vmatprep.subr.mxu0 0.0
    %v1974 = vand.u32 %v1398, 4294901760
    %1975 = vmatpush1.msra.mxu0 %v1974
    %1976 = vmatprep.subr.mxu0 0.0
    %v1977 = vand.u32 %v1397, 4294901760
    %1978 = vmatpush1.msra.mxu0 %v1977
    %1979 = vmatprep.subr.mxu0 0.0
    %v1980 = vand.u32 %v1396, 4294901760
    %1981 = vmatpush1.msra.mxu0 %v1980
    %1982 = vmatprep.subr.mxu0 0.0
    %v1983 = vand.u32 %v1395, 4294901760
    %1984 = vmatpush1.msra.mxu0 %v1983
    %1985 = vmatprep.subr.mxu0 0.0
    %v1986 = vand.u32 %v1394, 4294901760
    %1987 = vmatpush1.msra.mxu0 %v1986
    %1988 = vmatprep.subr.mxu0 0.0
    %v1989 = vand.u32 %v1393, 4294901760
    %1990 = vmatpush1.msra.mxu0 %v1989
    %1991 = vmatprep.subr.mxu0 0.0
    %v1992 = vand.u32 %v1392, 4294901760
    %1993 = vmatpush1.msra.mxu0 %v1992
    %1994 = vmatprep.subr.mxu0 0.0
    %v1995 = vand.u32 %v1391, 4294901760
    %1996 = vmatpush1.msra.mxu0 %v1995
    %1997 = vmatprep.subr.mxu0 0.0
    %v1998 = vand.u32 %v1390, 4294901760
    %1999 = vmatpush1.msra.mxu0 %v1998
    %2000 = vmatprep.subr.mxu0 0.0
    %v2001 = vand.u32 %v1389, 4294901760
    %2002 = vmatpush1.msra.mxu0 %v2001
    %2003 = vmatprep.subr.mxu0 0.0
    %v2004 = vand.u32 %v1388, 4294901760
    %2005 = vmatpush1.msra.mxu0 %v2004
    %2006 = vmatprep.subr.mxu0 0.0
    %2007 = vmatpush2.msra.mxu0 0.0
    %2008 = vmatprep.subr.mxu0 0.0
    %2009 = vmatpush2.msra.mxu0 0.0
    %2010 = vmatprep.subr.mxu0 0.0
    %2011 = vmatpush2.msra.mxu0 0.0
    %2012 = vmatprep.subr.mxu0 0.0
    %2013 = vmatpush2.msra.mxu0 0.0
    %2014 = vmatprep.subr.mxu0 0.0
    %2015 = vmatpush2.msra.mxu0 0.0
    %2016 = vmatprep.subr.mxu0 0.0
    %2017 = vmatpush2.msra.mxu0 0.0
    %2018 = vmatprep.subr.mxu0 0.0
    %2019 = vmatpush2.msra.mxu0 0.0
    %2020 = vmatprep.subr.mxu0 0.0
    %2021 = vmatpush2.msra.mxu0 0.0
    %2022 = vmatprep.subr.mxu0 0.0
    %2023 = vmatpush2.msra.mxu0 0.0
    %2024 = vmatprep.subr.mxu0 0.0
    %2025 = vmatpush2.msra.mxu0 0.0
    %2026 = vmatprep.subr.mxu0 0.0
    %2027 = vmatpush2.msra.mxu0 0.0
    %2028 = vmatprep.subr.mxu0 0.0
    %2029 = vmatpush2.msra.mxu0 0.0
    %2030 = vmatprep.subr.mxu0 0.0
    %2031 = vmatpush2.msra.mxu0 0.0
    %2032 = vmatprep.subr.mxu0 0.0
    %2033 = vmatpush2.msra.mxu0 0.0
    %2034 = vmatprep.subr.mxu0 0.0
    %2035 = vmatpush2.msra.mxu0 0.0
    %2036 = vmatprep.subr.mxu0 0.0
    %2037 = vmatpush2.msra.mxu0 0.0
    %2038 = vmatprep.mubr.f32.mxu0 0.0
    %v2039 = vand.u32 %v1386, 4294901760
    %2040 = vmatmul.mubr.f32.gmra.mxu0 %v2039
    %v2041 = vpop.f32.mrf.mxu0
    %v2042 = vadd.f32 %v1955, %v2041
    %v2043 = vpop.f32.mrf.mxu0
    %2044 = vdwg.mxu0
    %v2045 = vmul.f32 %v67, %v2042
    %v2046 = vadd.f32 %v2045, %v1386
    %2047 = vst [vmem:[#allocation8] sm:$0xff] %v2046
    // Predicated region
    $region26: #{tpu_custom_call.1} parent=1 // pred_check
      _
    $region27: #{tpu_custom_call.1} parent=1 // pred_check_branch
      %2049 = sbr.rel (0) target = $region29
    $region28: #{tpu_custom_call.1} parent=1 // pred_region
      %s2051 = ssub.s32 128, 128
      %2052 = vsyncadd [#allocation4], %s2051
      %s2054 = sshll.u32 [#allocation8], 4
      %s2055 = int_to_ptr.vmem [resolvable:$true] %s2054
      %2057 = dma.vmem_to_hbm [thread:$0]  %s2055, 128, %s3, [#allocation4]
    $region29: #{tpu_custom_call.1} parent=1 // pred_fallthru
      _
    // Predicated region
    $region30: #{tpu_custom_call.1} parent=1 // pred_check
      _
    $region31: #{tpu_custom_call.1} parent=1 // pred_check_branch
      %2059 = sbr.rel (0) target = $region33
    $region32: #{tpu_custom_call.1} parent=1 // pred_region
      %2060 = dma.done [#allocation4], 128
    $region33: #{tpu_custom_call.1} parent=1 // pred_fallthru
      _
    %2061 = vsyncpa [#allocation3], 1
    %2062 = vsyncpa [#allocation6], 1
    %2063 = vsyncpa [#allocation4], 1

</llo_original>
